<compile_context>
chip_gen: v7x
topology: tpu7x:2x2x1
jax: 0.10.0
libtpu: 0.0.40
codegen_flags: <defaults>
</compile_context>

<pallas_src>
import functools

import numpy as np
import jax
import jax.numpy as jnp
from jax import lax
from jax.experimental import pallas as pl
from jax.experimental.pallas import tpu as pltpu

LEAKY_SLOPE = 0.1     # nn.LeakyReLU(0.1) in the reference model
BN_EPS = 1e-5
CIN0_PAD = 8          # pad the single input channel up to 8 lanes

# (C_in, C_out, kernel, stride, padding, dilation) for the 8 conv+BN+LeakyReLU blocks:
#   encoder: base_channels=8, kernels [7,5,3,3], strides [2,2,1,1], pads [3,2,1,1]
#   temporal: 4x Conv1d(64, 64, 3, padding=d, dilation=d), d in [1,2,4,8]
LAYER_CFG = (
    (1, 8, 7, 2, 3, 1),
    (8, 16, 5, 2, 2, 1),
    (16, 32, 3, 1, 1, 1),
    (32, 64, 3, 1, 1, 1),
    (64, 64, 3, 1, 1, 1),
    (64, 64, 3, 1, 2, 2),
    (64, 64, 3, 1, 4, 4),
    (64, 64, 3, 1, 8, 8),
)


def _conv_out_len(t, k, s, p, d):
    return (t + 2 * p - d * (k - 1) - 1) // s + 1


def _rup(x, m=8):
    return ((x + m - 1) // m) * m


def _plan(T):
    """Static per-layer shapes: (cin_eff, cout, k, stride, pad, dil, t_in, t_out)."""
    shapes, t = [], T
    for (cin, cout, k, s, p, d) in LAYER_CFG:
        cin_eff = max(cin, CIN0_PAD)
        t_out = _conv_out_len(t, k, s, p, d)
        shapes.append((cin_eff, cout, k, s, p, d, t, t_out))
        t = t_out
    return shapes, t


# ----------------------------------------------------------------------------
# Fused Pallas kernel: whole network for one batch element per grid step
# ----------------------------------------------------------------------------
def _make_kernel(layer_shapes):
    n = len(layer_shapes)

    def kernel(*refs):
        x_ref = refs[0]                       # (T0, 8)  input, channels on lanes
        w_head_ref = refs[1 + 2 * n]          # (2, C)   merged onset/velocity head (bf16)
        b_head_ref = refs[2 + 2 * n]          # (2, 1)
        logit_ref = refs[3 + 2 * n]           # (2, T_out) lane-dense
        sig_ref = refs[4 + 2 * n]             # (2, T_out) lane-dense
        pad_buf = refs[5 + 2 * n]             # (R_max, C_max) f32: zero-padded activation
        tap_buf = refs[6 + 2 * n]             # (T_out_max, K_max) f32: stacked im2col taps

        h = x_ref[...]                        # (t_in, cin) f32 activations, time on rows
        for i, (cin, cout, k, s, p, d, t_in, t_out) in enumerate(layer_shapes):
            w_ref = refs[1 + 2 * i]           # (k*cin, cout) bf16, BN scale pre-folded
            sft_ref = refs[2 + 2 * i]         # (1, cout)     f32 conv bias + BN shift

            # Zero-padded activation in VMEM (rows [0, t_in+2p), cols [0, cin)).
            if p > 0:
                zpad = jnp.zeros((p, cin), jnp.float32)
                pad_buf[pl.ds(0, p), pl.ds(0, cin)] = zpad
                pad_buf[pl.ds(p + t_in, p), pl.ds(0, cin)] = zpad
            pad_buf[pl.ds(p, t_in), pl.ds(0, cin)] = h

            # im2col: k shifted (stride / dilation) row slices stacked on the lane axis.
            for j in range(k):
                if s == 1:
                    tap = pad_buf[pl.ds(j * d, t_out), pl.ds(0, cin)]
                else:
                    tap = pad_buf[pl.ds(j * d, t_out, stride=s), pl.ds(0, cin)]
                tap_buf[pl.ds(0, t_out), pl.ds(j * cin, cin)] = tap

            # Single MXU matmul per layer: (t_out, k*cin) x (k*cin, cout), bf16 in / f32 acc.
            taps = tap_buf[pl.ds(0, t_out), pl.ds(0, k * cin)].astype(jnp.bfloat16)
            y = jnp.dot(taps, w_ref[...], preferred_element_type=jnp.float32)
            y = y + sft_ref[...]                               # folded bias + BN shift
            h = jnp.where(y > 0, y, LEAKY_SLOPE * y)           # LeakyReLU(0.1); Dropout = id

        # Merged 1x1 heads, lane-dense output: (2, C) . (T_out, C)^T -> (2, T_out).
        hl = lax.dot_general(
            w_head_ref[...], h.astype(jnp.bfloat16),
            dimension_numbers=(((1,), (1,)), ((), ())),
            preferred_element_type=jnp.float32) + b_head_ref[...]
        logit_ref[...] = hl                    # row 0: onset logits, row 1: velocity logits
        sig_ref[...] = jax.nn.sigmoid(hl)      # row 0: onset probs,  row 1: velocities

    return kernel


# ----------------------------------------------------------------------------
# Parameter construction (host side)
# ----------------------------------------------------------------------------
def init_params(key):
    """Deterministic synthetic init mirroring SmallCnnTranscriber.__init__():
    kaiming-normal-like conv weights, zero conv bias, BatchNorm in eval mode with fresh
    running stats (mean=0, var=1, gamma=1, beta=0) folded into the weights (scale) and a
    per-channel shift.  Matmul weights are stored in bf16; f32 copies kept for the ref."""
    layers = []
    for (cin, cout, k, s, p, d) in LAYER_CFG:
        key, wk = jax.random.split(key)
        fan_out = cout * k
        std = (2.0 / (1.0 + LEAKY_SLOPE ** 2) / fan_out) ** 0.5
        w = jax.random.normal(wk, (cout, cin, k), jnp.float32) * std     # PyTorch OIK layout
        b = jnp.zeros((cout,), jnp.float32)
        gamma = jnp.ones((cout,), jnp.float32)
        beta = jnp.zeros((cout,), jnp.float32)
        rmean = jnp.zeros((cout,), jnp.float32)
        rvar = jnp.ones((cout,), jnp.float32)

        bn_scale = gamma / jnp.sqrt(rvar + BN_EPS)
        w_fold = w * bn_scale[:, None, None]                  # fold BN scale into weights
        shift = ((b - rmean) * bn_scale + beta)[None, :]      # (1, C_out)

        cin_eff = max(cin, CIN0_PAD)                          # layer 0: channels padded to 8
        w_cat = np.zeros((k * cin_eff, cout), np.float32)
        w_fold_np = np.asarray(w_fold)
        for j in range(k):
            w_cat[j * cin_eff:j * cin_eff + cin, :] = w_fold_np[:, :, j].T
        layers.append(dict(
            w_cat=jnp.asarray(w_cat, jnp.bfloat16),           # matmul weight (bf16)
            shift=jnp.asarray(shift, jnp.float32),
            w_fold=w_fold,                                    # f32 copy for the reference
            cfg=(cin, cout, k, s, p, d)))

    key, k_on, k_vl = jax.random.split(key, 3)
    C = LAYER_CFG[-1][1]
    head_std = 1.0 / (C ** 0.5)
    w_on = jax.random.normal(k_on, (1, C), jnp.float32) * head_std
    w_vel = jax.random.normal(k_vl, (1, C), jnp.float32) * head_std
    w_head_f32 = jnp.concatenate([w_on, w_vel], axis=0)       # (2, C): [onset; velocity]
    return dict(layers=layers,
                w_head=w_head_f32.astype(jnp.bfloat16),
                w_head_f32=w_head_f32,
                b_head=jnp.zeros((2, 1), jnp.float32))


# ----------------------------------------------------------------------------
# Forward (one pallas_call) + plain-JAX reference
# ----------------------------------------------------------------------------
def forward(params, x_nct):
    """x_nct: (B, input_channels, T) -- PyTorch NCT convention."""
    B, c0, T = x_nct.shape
    layer_shapes, t_final = _plan(T)

    x_ntc = jnp.transpose(x_nct, (0, 2, 1)).astype(jnp.float32)            # NCT -> NTC
    x_ntc = jnp.pad(x_ntc, ((0, 0), (0, 0), (0, CIN0_PAD - c0)))           # pad C_in to 8

    operands = [x_ntc]
    in_specs = [pl.BlockSpec((None, T, CIN0_PAD), lambda b: (b, 0, 0))]
    for layer in params["layers"]:
        w, sft = layer["w_cat"], layer["shift"]
        operands += [w, sft]
        in_specs += [pl.BlockSpec(w.shape, lambda b: (0, 0)),
                     pl.BlockSpec(sft.shape, lambda b: (0, 0))]
    operands += [params["w_head"], params["b_head"]]
    in_specs += [pl.BlockSpec(params["w_head"].shape, lambda b: (0, 0)),
                 pl.BlockSpec(params["b_head"].shape, lambda b: (0, 0))]

    # Scratch sizing (all static): padded activations and stacked im2col taps.
    r_max = _rup(max(t_in + 2 * p for (_, _, _, _, p, _, t_in, _) in layer_shapes))
    c_max = _rup(max(cin for (cin, *_rest) in layer_shapes))
    t_out_max = _rup(max(t_out for (*_rest, t_out) in layer_shapes))
    kc_max = max(k * cin for (cin, _, k, *_rest) in layer_shapes)

    out_sds = jax.ShapeDtypeStruct((B, 2, t_final), jnp.float32)
    out_spec = pl.BlockSpec((None, 2, t_final), lambda b: (b, 0, 0))

    logits, sig = pl.pallas_call(
        _make_kernel(layer_shapes),
        out_shape=(out_sds, out_sds),
        grid=(B,),
        in_specs=in_specs,
        out_specs=(out_spec, out_spec),
        scratch_shapes=[pltpu.VMEM((r_max, c_max), jnp.float32),
                        pltpu.VMEM((t_out_max, kc_max), jnp.float32)],
        compiler_params=pltpu.CompilerParams(dimension_semantics=("parallel",)),
    )(*operands)

    return {
        "onset_logits": logits[:, 0, :],
        "onset_probs": sig[:, 0, :],
        "velocities": sig[:, 1, :],
    }


def reference_forward(params, x_nct):
    """Plain-JAX (XLA) f32 reference of the same eval-mode forward, for validation."""
    hp = jax.lax.Precision.HIGHEST
    h = x_nct.astype(jnp.float32)                                        # (B, C, T)
    for layer in params["layers"]:
        _, _, k, s, p, d = layer["cfg"]
        h = lax.conv_general_dilated(
            h, layer["w_fold"], window_strides=(s,), padding=[(p, p)],
            rhs_dilation=(d,), dimension_numbers=("NCH", "OIH", "NCH"), precision=hp)
        h = h + layer["shift"][0][None, :, None]
        h = jnp.where(h > 0, h, LEAKY_SLOPE * h)
    wh = params["w_head_f32"]
    onl = jnp.einsum("bct,c->bt", h, wh[0], precision=hp) + params["b_head"][0, 0]
    vll = jnp.einsum("bct,c->bt", h, wh[1], precision=hp) + params["b_head"][1, 0]
    return {"onset_logits": onl, "onset_probs": jax.nn.sigmoid(onl),
            "velocities": jax.nn.sigmoid(vll)}


if __name__ == "__main__":
    key = jax.random.PRNGKey(0)
    pkey, xkey = jax.random.split(key)
    params = init_params(pkey)

    B, C_IN, T = 2, 1, 64                       # [batch, input_channels, time]
    x = jax.random.normal(xkey, (B, C_IN, T), jnp.float32)

    _, t_out = _plan(T)                         # 64 -> /2 -> /2 => 16
    fwd = jax.jit(functools.partial(forward, params))
    out = fwd(x)
    out = jax.tree_util.tree_map(jax.block_until_ready, out)

    assert out["onset_logits"].shape == (B, t_out)
    assert out["onset_probs"].shape == (B, t_out)
    assert out["velocities"].shape == (B, t_out)
    for v in out.values():
        assert bool(jnp.all(jnp.isfinite(v)))
    assert bool(jnp.all((out["onset_probs"] >= 0) & (out["onset_probs"] <= 1)))
    assert bool(jnp.all((out["velocities"] >= 0) & (out["velocities"] <= 1)))

    # Numerical check against a plain-JAX f32 reference (kernel matmuls run in bf16).
    ref = reference_forward(params, x)
    for name in ("onset_logits", "onset_probs", "velocities"):
        assert bool(jnp.allclose(out[name], ref[name], atol=5e-2, rtol=5e-2)), name

    print("KERNEL_OK")
</pallas_src>

<mosaic_0001>
module attributes {stable_mosaic.version = 11 : i64} {
  func.func @kernel(%arg0: i32, %arg1: memref<1x64x8xf32, #tpu.memory_space<vmem>>, %arg2: memref<56x8xbf16, #tpu.memory_space<vmem>>, %arg3: memref<1x8xf32, #tpu.memory_space<vmem>>, %arg4: memref<40x16xbf16, #tpu.memory_space<vmem>>, %arg5: memref<1x16xf32, #tpu.memory_space<vmem>>, %arg6: memref<48x32xbf16, #tpu.memory_space<vmem>>, %arg7: memref<1x32xf32, #tpu.memory_space<vmem>>, %arg8: memref<96x64xbf16, #tpu.memory_space<vmem>>, %arg9: memref<1x64xf32, #tpu.memory_space<vmem>>, %arg10: memref<192x64xbf16, #tpu.memory_space<vmem>>, %arg11: memref<1x64xf32, #tpu.memory_space<vmem>>, %arg12: memref<192x64xbf16, #tpu.memory_space<vmem>>, %arg13: memref<1x64xf32, #tpu.memory_space<vmem>>, %arg14: memref<192x64xbf16, #tpu.memory_space<vmem>>, %arg15: memref<1x64xf32, #tpu.memory_space<vmem>>, %arg16: memref<192x64xbf16, #tpu.memory_space<vmem>>, %arg17: memref<1x64xf32, #tpu.memory_space<vmem>>, %arg18: memref<2x64xbf16, #tpu.memory_space<vmem>>, %arg19: memref<2x1xf32, #tpu.memory_space<vmem>>, %arg20: memref<1x2x16xf32, #tpu.memory_space<vmem>>, %arg21: memref<1x2x16xf32, #tpu.memory_space<vmem>>, %arg22: memref<72x64xf32, #tpu.memory_space<vmem>>, %arg23: memref<32x192xf32, #tpu.memory_space<vmem>>) attributes {dimension_semantics = [#tpu.dimension_semantics<parallel>], iteration_bounds = array<i64: 2>, scalar_prefetch = 0 : i64, scratch_operands = 2 : i64, tpu.core_type = #tpu.core_type<tc>, window_params = [{transform_indices = @transform_0, window_bounds = array<i64: 1, 64, 8>}, {pipeline_mode = #tpu.pipeline_mode<synchronous>, transform_indices = @transform_1, window_bounds = array<i64: 56, 8>}, {pipeline_mode = #tpu.pipeline_mode<synchronous>, transform_indices = @transform_2, window_bounds = array<i64: 1, 8>}, {pipeline_mode = #tpu.pipeline_mode<synchronous>, transform_indices = @transform_3, window_bounds = array<i64: 40, 16>}, {pipeline_mode = #tpu.pipeline_mode<synchronous>, transform_indices = @transform_4, window_bounds = array<i64: 1, 16>}, {pipeline_mode = #tpu.pipeline_mode<synchronous>, transform_indices = @transform_5, window_bounds = array<i64: 48, 32>}, {pipeline_mode = #tpu.pipeline_mode<synchronous>, transform_indices = @transform_6, window_bounds = array<i64: 1, 32>}, {pipeline_mode = #tpu.pipeline_mode<synchronous>, transform_indices = @transform_7, window_bounds = array<i64: 96, 64>}, {pipeline_mode = #tpu.pipeline_mode<synchronous>, transform_indices = @transform_8, window_bounds = array<i64: 1, 64>}, {pipeline_mode = #tpu.pipeline_mode<synchronous>, transform_indices = @transform_9, window_bounds = array<i64: 192, 64>}, {pipeline_mode = #tpu.pipeline_mode<synchronous>, transform_indices = @transform_10, window_bounds = array<i64: 1, 64>}, {pipeline_mode = #tpu.pipeline_mode<synchronous>, transform_indices = @transform_11, window_bounds = array<i64: 192, 64>}, {pipeline_mode = #tpu.pipeline_mode<synchronous>, transform_indices = @transform_12, window_bounds = array<i64: 1, 64>}, {pipeline_mode = #tpu.pipeline_mode<synchronous>, transform_indices = @transform_13, window_bounds = array<i64: 192, 64>}, {pipeline_mode = #tpu.pipeline_mode<synchronous>, transform_indices = @transform_14, window_bounds = array<i64: 1, 64>}, {pipeline_mode = #tpu.pipeline_mode<synchronous>, transform_indices = @transform_15, window_bounds = array<i64: 192, 64>}, {pipeline_mode = #tpu.pipeline_mode<synchronous>, transform_indices = @transform_16, window_bounds = array<i64: 1, 64>}, {pipeline_mode = #tpu.pipeline_mode<synchronous>, transform_indices = @transform_17, window_bounds = array<i64: 2, 64>}, {pipeline_mode = #tpu.pipeline_mode<synchronous>, transform_indices = @transform_18, window_bounds = array<i64: 2, 1>}, {transform_indices = @transform_19, window_bounds = array<i64: 1, 2, 16>}, {transform_indices = @transform_20, window_bounds = array<i64: 1, 2, 16>}]} {
    %c0 = arith.constant 0 : index
    %c0_0 = arith.constant 0 : index
    %c0_1 = arith.constant 0 : index
    %0 = vector.load %arg1[%c0, %c0_0, %c0_1] : memref<1x64x8xf32, #tpu.memory_space<vmem>>, vector<1x64x8xf32>
    %1 = vector.shape_cast %0 : vector<1x64x8xf32> to vector<64x8xf32>
    %cst = arith.constant 0.000000e+00 : f32
    %2 = vector.broadcast %cst : f32 to vector<3x8xf32>
    %c0_2 = arith.constant 0 : index
    %c0_3 = arith.constant 0 : index
    %3 = vector.load %arg22[%c0_2, %c0_3] : memref<72x64xf32, #tpu.memory_space<vmem>>, vector<3x8xf32>
    tpu.vector_store %arg22[%c0_2, %c0_3], %2 {strides = array<i32>} : memref<72x64xf32, #tpu.memory_space<vmem>>, vector<3x8xf32>,
    %c67 = arith.constant 67 : index
    %c0_4 = arith.constant 0 : index
    %4 = vector.load %arg22[%c67, %c0_4] : memref<72x64xf32, #tpu.memory_space<vmem>>, vector<3x8xf32>
    tpu.vector_store %arg22[%c67, %c0_4], %2 {strides = array<i32>} : memref<72x64xf32, #tpu.memory_space<vmem>>, vector<3x8xf32>,
    %c3 = arith.constant 3 : index
    %c0_5 = arith.constant 0 : index
    %5 = vector.load %arg22[%c3, %c0_5] : memref<72x64xf32, #tpu.memory_space<vmem>>, vector<64x8xf32>
    tpu.vector_store %arg22[%c3, %c0_5], %1 {strides = array<i32>} : memref<72x64xf32, #tpu.memory_space<vmem>>, vector<64x8xf32>,
    %c0_6 = arith.constant 0 : index
    %c0_7 = arith.constant 0 : index
    %6 = tpu.strided_load %arg22[%c0_6, %c0_7] {strides = array<i32: 2, 1>} : memref<72x64xf32, #tpu.memory_space<vmem>>, vector<32x8xf32>
    %c0_8 = arith.constant 0 : index
    %c0_9 = arith.constant 0 : index
    %7 = vector.load %arg23[%c0_8, %c0_9] : memref<32x192xf32, #tpu.memory_space<vmem>>, vector<32x8xf32>
    tpu.vector_store %arg23[%c0_8, %c0_9], %6 {strides = array<i32>} : memref<32x192xf32, #tpu.memory_space<vmem>>, vector<32x8xf32>,
    %c1 = arith.constant 1 : index
    %c0_10 = arith.constant 0 : index
    %8 = tpu.strided_load %arg22[%c1, %c0_10] {strides = array<i32: 2, 1>} : memref<72x64xf32, #tpu.memory_space<vmem>>, vector<32x8xf32>
    %c0_11 = arith.constant 0 : index
    %c8 = arith.constant 8 : index
    %9 = vector.load %arg23[%c0_11, %c8] : memref<32x192xf32, #tpu.memory_space<vmem>>, vector<32x8xf32>
    tpu.vector_store %arg23[%c0_11, %c8], %8 {strides = array<i32>} : memref<32x192xf32, #tpu.memory_space<vmem>>, vector<32x8xf32>,
    %c2 = arith.constant 2 : index
    %c0_12 = arith.constant 0 : index
    %10 = tpu.strided_load %arg22[%c2, %c0_12] {strides = array<i32: 2, 1>} : memref<72x64xf32, #tpu.memory_space<vmem>>, vector<32x8xf32>
    %c0_13 = arith.constant 0 : index
    %c16 = arith.constant 16 : index
    %11 = vector.load %arg23[%c0_13, %c16] : memref<32x192xf32, #tpu.memory_space<vmem>>, vector<32x8xf32>
    tpu.vector_store %arg23[%c0_13, %c16], %10 {strides = array<i32>} : memref<32x192xf32, #tpu.memory_space<vmem>>, vector<32x8xf32>,
    %c3_14 = arith.constant 3 : index
    %c0_15 = arith.constant 0 : index
    %12 = tpu.strided_load %arg22[%c3_14, %c0_15] {strides = array<i32: 2, 1>} : memref<72x64xf32, #tpu.memory_space<vmem>>, vector<32x8xf32>
    %c0_16 = arith.constant 0 : index
    %c24 = arith.constant 24 : index
    %13 = vector.load %arg23[%c0_16, %c24] : memref<32x192xf32, #tpu.memory_space<vmem>>, vector<32x8xf32>
    tpu.vector_store %arg23[%c0_16, %c24], %12 {strides = array<i32>} : memref<32x192xf32, #tpu.memory_space<vmem>>, vector<32x8xf32>,
    %c4 = arith.constant 4 : index
    %c0_17 = arith.constant 0 : index
    %14 = tpu.strided_load %arg22[%c4, %c0_17] {strides = array<i32: 2, 1>} : memref<72x64xf32, #tpu.memory_space<vmem>>, vector<32x8xf32>
    %c0_18 = arith.constant 0 : index
    %c32 = arith.constant 32 : index
    %15 = vector.load %arg23[%c0_18, %c32] : memref<32x192xf32, #tpu.memory_space<vmem>>, vector<32x8xf32>
    tpu.vector_store %arg23[%c0_18, %c32], %14 {strides = array<i32>} : memref<32x192xf32, #tpu.memory_space<vmem>>, vector<32x8xf32>,
    %c5 = arith.constant 5 : index
    %c0_19 = arith.constant 0 : index
    %16 = tpu.strided_load %arg22[%c5, %c0_19] {strides = array<i32: 2, 1>} : memref<72x64xf32, #tpu.memory_space<vmem>>, vector<32x8xf32>
    %c0_20 = arith.constant 0 : index
    %c40 = arith.constant 40 : index
    %17 = vector.load %arg23[%c0_20, %c40] : memref<32x192xf32, #tpu.memory_space<vmem>>, vector<32x8xf32>
    tpu.vector_store %arg23[%c0_20, %c40], %16 {strides = array<i32>} : memref<32x192xf32, #tpu.memory_space<vmem>>, vector<32x8xf32>,
    %c6 = arith.constant 6 : index
    %c0_21 = arith.constant 0 : index
    %18 = tpu.strided_load %arg22[%c6, %c0_21] {strides = array<i32: 2, 1>} : memref<72x64xf32, #tpu.memory_space<vmem>>, vector<32x8xf32>
    %c0_22 = arith.constant 0 : index
    %c48 = arith.constant 48 : index
    %19 = vector.load %arg23[%c0_22, %c48] : memref<32x192xf32, #tpu.memory_space<vmem>>, vector<32x8xf32>
    tpu.vector_store %arg23[%c0_22, %c48], %18 {strides = array<i32>} : memref<32x192xf32, #tpu.memory_space<vmem>>, vector<32x8xf32>,
    %c0_23 = arith.constant 0 : index
    %c0_24 = arith.constant 0 : index
    %20 = vector.load %arg23[%c0_23, %c0_24] : memref<32x192xf32, #tpu.memory_space<vmem>>, vector<32x56xf32>
    %21 = arith.truncf %20 : vector<32x56xf32> to vector<32x56xbf16>
    %c0_25 = arith.constant 0 : index
    %c0_26 = arith.constant 0 : index
    %22 = vector.load %arg2[%c0_25, %c0_26] : memref<56x8xbf16, #tpu.memory_space<vmem>>, vector<56x8xbf16>
    %cst_27 = arith.constant dense<0.000000e+00> : vector<32x8xf32>
    %23 = tpu.matmul %21, %22, %cst_27 {dimension_numbers = #tpu.dot_dimension_numbers<[1], [0], [0], [1], [0, 0, 1, 1], [], []>} : vector<32x56xbf16>, vector<56x8xbf16>, vector<32x8xf32> -> vector<32x8xf32>
    %c0_28 = arith.constant 0 : index
    %c0_29 = arith.constant 0 : index
    %24 = vector.load %arg3[%c0_28, %c0_29] : memref<1x8xf32, #tpu.memory_space<vmem>>, vector<1x8xf32>
    %25 = vector.broadcast %24 : vector<1x8xf32> to vector<32x8xf32>
    %26 = arith.addf %23, %25 : vector<32x8xf32>
    %cst_30 = arith.constant 0.000000e+00 : f32
    %27 = vector.broadcast %cst_30 : f32 to vector<32x8xf32>
    %28 = arith.cmpf ogt, %26, %27 : vector<32x8xf32>
    %cst_31 = arith.constant 1.000000e-01 : f32
    %29 = vector.broadcast %cst_31 : f32 to vector<32x8xf32>
    %30 = arith.mulf %29, %26 : vector<32x8xf32>
    %31 = arith.select %28, %26, %30 : vector<32x8xi1>, vector<32x8xf32>
    %cst_32 = arith.constant 0.000000e+00 : f32
    %32 = vector.broadcast %cst_32 : f32 to vector<2x8xf32>
    %c0_33 = arith.constant 0 : index
    %c0_34 = arith.constant 0 : index
    %33 = vector.load %arg22[%c0_33, %c0_34] : memref<72x64xf32, #tpu.memory_space<vmem>>, vector<2x8xf32>
    tpu.vector_store %arg22[%c0_33, %c0_34], %32 {strides = array<i32>} : memref<72x64xf32, #tpu.memory_space<vmem>>, vector<2x8xf32>,
    %c34 = arith.constant 34 : index
    %c0_35 = arith.constant 0 : index
    %34 = vector.load %arg22[%c34, %c0_35] : memref<72x64xf32, #tpu.memory_space<vmem>>, vector<2x8xf32>
    tpu.vector_store %arg22[%c34, %c0_35], %32 {strides = array<i32>} : memref<72x64xf32, #tpu.memory_space<vmem>>, vector<2x8xf32>,
    %c2_36 = arith.constant 2 : index
    %c0_37 = arith.constant 0 : index
    %35 = vector.load %arg22[%c2_36, %c0_37] : memref<72x64xf32, #tpu.memory_space<vmem>>, vector<32x8xf32>
    tpu.vector_store %arg22[%c2_36, %c0_37], %31 {strides = array<i32>} : memref<72x64xf32, #tpu.memory_space<vmem>>, vector<32x8xf32>,
    %c0_38 = arith.constant 0 : index
    %c0_39 = arith.constant 0 : index
    %36 = tpu.strided_load %arg22[%c0_38, %c0_39] {strides = array<i32: 2, 1>} : memref<72x64xf32, #tpu.memory_space<vmem>>, vector<16x8xf32>
    %c0_40 = arith.constant 0 : index
    %c0_41 = arith.constant 0 : index
    %37 = vector.load %arg23[%c0_40, %c0_41] : memref<32x192xf32, #tpu.memory_space<vmem>>, vector<16x8xf32>
    tpu.vector_store %arg23[%c0_40, %c0_41], %36 {strides = array<i32>} : memref<32x192xf32, #tpu.memory_space<vmem>>, vector<16x8xf32>,
    %c1_42 = arith.constant 1 : index
    %c0_43 = arith.constant 0 : index
    %38 = tpu.strided_load %arg22[%c1_42, %c0_43] {strides = array<i32: 2, 1>} : memref<72x64xf32, #tpu.memory_space<vmem>>, vector<16x8xf32>
    %c0_44 = arith.constant 0 : index
    %c8_45 = arith.constant 8 : index
    %39 = vector.load %arg23[%c0_44, %c8_45] : memref<32x192xf32, #tpu.memory_space<vmem>>, vector<16x8xf32>
    tpu.vector_store %arg23[%c0_44, %c8_45], %38 {strides = array<i32>} : memref<32x192xf32, #tpu.memory_space<vmem>>, vector<16x8xf32>,
    %c2_46 = arith.constant 2 : index
    %c0_47 = arith.constant 0 : index
    %40 = tpu.strided_load %arg22[%c2_46, %c0_47] {strides = array<i32: 2, 1>} : memref<72x64xf32, #tpu.memory_space<vmem>>, vector<16x8xf32>
    %c0_48 = arith.constant 0 : index
    %c16_49 = arith.constant 16 : index
    %41 = vector.load %arg23[%c0_48, %c16_49] : memref<32x192xf32, #tpu.memory_space<vmem>>, vector<16x8xf32>
    tpu.vector_store %arg23[%c0_48, %c16_49], %40 {strides = array<i32>} : memref<32x192xf32, #tpu.memory_space<vmem>>, vector<16x8xf32>,
    %c3_50 = arith.constant 3 : index
    %c0_51 = arith.constant 0 : index
    %42 = tpu.strided_load %arg22[%c3_50, %c0_51] {strides = array<i32: 2, 1>} : memref<72x64xf32, #tpu.memory_space<vmem>>, vector<16x8xf32>
    %c0_52 = arith.constant 0 : index
    %c24_53 = arith.constant 24 : index
    %43 = vector.load %arg23[%c0_52, %c24_53] : memref<32x192xf32, #tpu.memory_space<vmem>>, vector<16x8xf32>
    tpu.vector_store %arg23[%c0_52, %c24_53], %42 {strides = array<i32>} : memref<32x192xf32, #tpu.memory_space<vmem>>, vector<16x8xf32>,
    %c4_54 = arith.constant 4 : index
    %c0_55 = arith.constant 0 : index
    %44 = tpu.strided_load %arg22[%c4_54, %c0_55] {strides = array<i32: 2, 1>} : memref<72x64xf32, #tpu.memory_space<vmem>>, vector<16x8xf32>
    %c0_56 = arith.constant 0 : index
    %c32_57 = arith.constant 32 : index
    %45 = vector.load %arg23[%c0_56, %c32_57] : memref<32x192xf32, #tpu.memory_space<vmem>>, vector<16x8xf32>
    tpu.vector_store %arg23[%c0_56, %c32_57], %44 {strides = array<i32>} : memref<32x192xf32, #tpu.memory_space<vmem>>, vector<16x8xf32>,
    %c0_58 = arith.constant 0 : index
    %c0_59 = arith.constant 0 : index
    %46 = vector.load %arg23[%c0_58, %c0_59] : memref<32x192xf32, #tpu.memory_space<vmem>>, vector<16x40xf32>
    %47 = arith.truncf %46 : vector<16x40xf32> to vector<16x40xbf16>
    %c0_60 = arith.constant 0 : index
    %c0_61 = arith.constant 0 : index
    %48 = vector.load %arg4[%c0_60, %c0_61] : memref<40x16xbf16, #tpu.memory_space<vmem>>, vector<40x16xbf16>
    %cst_62 = arith.constant dense<0.000000e+00> : vector<16x16xf32>
    %49 = tpu.matmul %47, %48, %cst_62 {dimension_numbers = #tpu.dot_dimension_numbers<[1], [0], [0], [1], [0, 0, 1, 1], [], []>} : vector<16x40xbf16>, vector<40x16xbf16>, vector<16x16xf32> -> vector<16x16xf32>
    %c0_63 = arith.constant 0 : index
    %c0_64 = arith.constant 0 : index
    %50 = vector.load %arg5[%c0_63, %c0_64] : memref<1x16xf32, #tpu.memory_space<vmem>>, vector<1x16xf32>
    %51 = vector.broadcast %50 : vector<1x16xf32> to vector<16x16xf32>
    %52 = arith.addf %49, %51 : vector<16x16xf32>
    %cst_65 = arith.constant 0.000000e+00 : f32
    %53 = vector.broadcast %cst_65 : f32 to vector<16x16xf32>
    %54 = arith.cmpf ogt, %52, %53 : vector<16x16xf32>
    %cst_66 = arith.constant 1.000000e-01 : f32
    %55 = vector.broadcast %cst_66 : f32 to vector<16x16xf32>
    %56 = arith.mulf %55, %52 : vector<16x16xf32>
    %57 = arith.select %54, %52, %56 : vector<16x16xi1>, vector<16x16xf32>
    %cst_67 = arith.constant 0.000000e+00 : f32
    %58 = vector.broadcast %cst_67 : f32 to vector<1x16xf32>
    %c0_68 = arith.constant 0 : index
    %c0_69 = arith.constant 0 : index
    %59 = vector.load %arg22[%c0_68, %c0_69] : memref<72x64xf32, #tpu.memory_space<vmem>>, vector<1x16xf32>
    tpu.vector_store %arg22[%c0_68, %c0_69], %58 {strides = array<i32>} : memref<72x64xf32, #tpu.memory_space<vmem>>, vector<1x16xf32>,
    %c17 = arith.constant 17 : index
    %c0_70 = arith.constant 0 : index
    %60 = vector.load %arg22[%c17, %c0_70] : memref<72x64xf32, #tpu.memory_space<vmem>>, vector<1x16xf32>
    tpu.vector_store %arg22[%c17, %c0_70], %58 {strides = array<i32>} : memref<72x64xf32, #tpu.memory_space<vmem>>, vector<1x16xf32>,
    %c1_71 = arith.constant 1 : index
    %c0_72 = arith.constant 0 : index
    %61 = vector.load %arg22[%c1_71, %c0_72] : memref<72x64xf32, #tpu.memory_space<vmem>>, vector<16x16xf32>
    tpu.vector_store %arg22[%c1_71, %c0_72], %57 {strides = array<i32>} : memref<72x64xf32, #tpu.memory_space<vmem>>, vector<16x16xf32>,
    %c0_73 = arith.constant 0 : index
    %c0_74 = arith.constant 0 : index
    %62 = vector.load %arg22[%c0_73, %c0_74] : memref<72x64xf32, #tpu.memory_space<vmem>>, vector<16x16xf32>
    %c0_75 = arith.constant 0 : index
    %c0_76 = arith.constant 0 : index
    %63 = vector.load %arg23[%c0_75, %c0_76] : memref<32x192xf32, #tpu.memory_space<vmem>>, vector<16x16xf32>
    tpu.vector_store %arg23[%c0_75, %c0_76], %62 {strides = array<i32>} : memref<32x192xf32, #tpu.memory_space<vmem>>, vector<16x16xf32>,
    %c1_77 = arith.constant 1 : index
    %c0_78 = arith.constant 0 : index
    %64 = vector.load %arg22[%c1_77, %c0_78] : memref<72x64xf32, #tpu.memory_space<vmem>>, vector<16x16xf32>
    %c0_79 = arith.constant 0 : index
    %c16_80 = arith.constant 16 : index
    %65 = vector.load %arg23[%c0_79, %c16_80] : memref<32x192xf32, #tpu.memory_space<vmem>>, vector<16x16xf32>
    tpu.vector_store %arg23[%c0_79, %c16_80], %64 {strides = array<i32>} : memref<32x192xf32, #tpu.memory_space<vmem>>, vector<16x16xf32>,
    %c2_81 = arith.constant 2 : index
    %c0_82 = arith.constant 0 : index
    %66 = vector.load %arg22[%c2_81, %c0_82] : memref<72x64xf32, #tpu.memory_space<vmem>>, vector<16x16xf32>
    %c0_83 = arith.constant 0 : index
    %c32_84 = arith.constant 32 : index
    %67 = vector.load %arg23[%c0_83, %c32_84] : memref<32x192xf32, #tpu.memory_space<vmem>>, vector<16x16xf32>
    tpu.vector_store %arg23[%c0_83, %c32_84], %66 {strides = array<i32>} : memref<32x192xf32, #tpu.memory_space<vmem>>, vector<16x16xf32>,
    %c0_85 = arith.constant 0 : index
    %c0_86 = arith.constant 0 : index
    %68 = vector.load %arg23[%c0_85, %c0_86] : memref<32x192xf32, #tpu.memory_space<vmem>>, vector<16x48xf32>
    %69 = arith.truncf %68 : vector<16x48xf32> to vector<16x48xbf16>
    %c0_87 = arith.constant 0 : index
    %c0_88 = arith.constant 0 : index
    %70 = vector.load %arg6[%c0_87, %c0_88] : memref<48x32xbf16, #tpu.memory_space<vmem>>, vector<48x32xbf16>
    %cst_89 = arith.constant dense<0.000000e+00> : vector<16x32xf32>
    %71 = tpu.matmul %69, %70, %cst_89 {dimension_numbers = #tpu.dot_dimension_numbers<[1], [0], [0], [1], [0, 0, 1, 1], [], []>} : vector<16x48xbf16>, vector<48x32xbf16>, vector<16x32xf32> -> vector<16x32xf32>
    %c0_90 = arith.constant 0 : index
    %c0_91 = arith.constant 0 : index
    %72 = vector.load %arg7[%c0_90, %c0_91] : memref<1x32xf32, #tpu.memory_space<vmem>>, vector<1x32xf32>
    %73 = vector.broadcast %72 : vector<1x32xf32> to vector<16x32xf32>
    %74 = arith.addf %71, %73 : vector<16x32xf32>
    %cst_92 = arith.constant 0.000000e+00 : f32
    %75 = vector.broadcast %cst_92 : f32 to vector<16x32xf32>
    %76 = arith.cmpf ogt, %74, %75 : vector<16x32xf32>
    %cst_93 = arith.constant 1.000000e-01 : f32
    %77 = vector.broadcast %cst_93 : f32 to vector<16x32xf32>
    %78 = arith.mulf %77, %74 : vector<16x32xf32>
    %79 = arith.select %76, %74, %78 : vector<16x32xi1>, vector<16x32xf32>
    %cst_94 = arith.constant 0.000000e+00 : f32
    %80 = vector.broadcast %cst_94 : f32 to vector<1x32xf32>
    %c0_95 = arith.constant 0 : index
    %c0_96 = arith.constant 0 : index
    %81 = vector.load %arg22[%c0_95, %c0_96] : memref<72x64xf32, #tpu.memory_space<vmem>>, vector<1x32xf32>
    tpu.vector_store %arg22[%c0_95, %c0_96], %80 {strides = array<i32>} : memref<72x64xf32, #tpu.memory_space<vmem>>, vector<1x32xf32>,
    %c17_97 = arith.constant 17 : index
    %c0_98 = arith.constant 0 : index
    %82 = vector.load %arg22[%c17_97, %c0_98] : memref<72x64xf32, #tpu.memory_space<vmem>>, vector<1x32xf32>
    tpu.vector_store %arg22[%c17_97, %c0_98], %80 {strides = array<i32>} : memref<72x64xf32, #tpu.memory_space<vmem>>, vector<1x32xf32>,
    %c1_99 = arith.constant 1 : index
    %c0_100 = arith.constant 0 : index
    %83 = vector.load %arg22[%c1_99, %c0_100] : memref<72x64xf32, #tpu.memory_space<vmem>>, vector<16x32xf32>
    tpu.vector_store %arg22[%c1_99, %c0_100], %79 {strides = array<i32>} : memref<72x64xf32, #tpu.memory_space<vmem>>, vector<16x32xf32>,
    %c0_101 = arith.constant 0 : index
    %c0_102 = arith.constant 0 : index
    %84 = vector.load %arg22[%c0_101, %c0_102] : memref<72x64xf32, #tpu.memory_space<vmem>>, vector<16x32xf32>
    %c0_103 = arith.constant 0 : index
    %c0_104 = arith.constant 0 : index
    %85 = vector.load %arg23[%c0_103, %c0_104] : memref<32x192xf32, #tpu.memory_space<vmem>>, vector<16x32xf32>
    tpu.vector_store %arg23[%c0_103, %c0_104], %84 {strides = array<i32>} : memref<32x192xf32, #tpu.memory_space<vmem>>, vector<16x32xf32>,
    %c1_105 = arith.constant 1 : index
    %c0_106 = arith.constant 0 : index
    %86 = vector.load %arg22[%c1_105, %c0_106] : memref<72x64xf32, #tpu.memory_space<vmem>>, vector<16x32xf32>
    %c0_107 = arith.constant 0 : index
    %c32_108 = arith.constant 32 : index
    %87 = vector.load %arg23[%c0_107, %c32_108] : memref<32x192xf32, #tpu.memory_space<vmem>>, vector<16x32xf32>
    tpu.vector_store %arg23[%c0_107, %c32_108], %86 {strides = array<i32>} : memref<32x192xf32, #tpu.memory_space<vmem>>, vector<16x32xf32>,
    %c2_109 = arith.constant 2 : index
    %c0_110 = arith.constant 0 : index
    %88 = vector.load %arg22[%c2_109, %c0_110] : memref<72x64xf32, #tpu.memory_space<vmem>>, vector<16x32xf32>
    %c0_111 = arith.constant 0 : index
    %c64 = arith.constant 64 : index
    %89 = vector.load %arg23[%c0_111, %c64] : memref<32x192xf32, #tpu.memory_space<vmem>>, vector<16x32xf32>
    tpu.vector_store %arg23[%c0_111, %c64], %88 {strides = array<i32>} : memref<32x192xf32, #tpu.memory_space<vmem>>, vector<16x32xf32>,
    %c0_112 = arith.constant 0 : index
    %c0_113 = arith.constant 0 : index
    %90 = vector.load %arg23[%c0_112, %c0_113] : memref<32x192xf32, #tpu.memory_space<vmem>>, vector<16x96xf32>
    %91 = arith.truncf %90 : vector<16x96xf32> to vector<16x96xbf16>
    %c0_114 = arith.constant 0 : index
    %c0_115 = arith.constant 0 : index
    %92 = vector.load %arg8[%c0_114, %c0_115] : memref<96x64xbf16, #tpu.memory_space<vmem>>, vector<96x64xbf16>
    %cst_116 = arith.constant dense<0.000000e+00> : vector<16x64xf32>
    %93 = tpu.matmul %91, %92, %cst_116 {dimension_numbers = #tpu.dot_dimension_numbers<[1], [0], [0], [1], [0, 0, 1, 1], [], []>} : vector<16x96xbf16>, vector<96x64xbf16>, vector<16x64xf32> -> vector<16x64xf32>
    %c0_117 = arith.constant 0 : index
    %c0_118 = arith.constant 0 : index
    %94 = vector.load %arg9[%c0_117, %c0_118] : memref<1x64xf32, #tpu.memory_space<vmem>>, vector<1x64xf32>
    %95 = vector.broadcast %94 : vector<1x64xf32> to vector<16x64xf32>
    %96 = arith.addf %93, %95 : vector<16x64xf32>
    %cst_119 = arith.constant 0.000000e+00 : f32
    %97 = vector.broadcast %cst_119 : f32 to vector<16x64xf32>
    %98 = arith.cmpf ogt, %96, %97 : vector<16x64xf32>
    %cst_120 = arith.constant 1.000000e-01 : f32
    %99 = vector.broadcast %cst_120 : f32 to vector<16x64xf32>
    %100 = arith.mulf %99, %96 : vector<16x64xf32>
    %101 = arith.select %98, %96, %100 : vector<16x64xi1>, vector<16x64xf32>
    %cst_121 = arith.constant 0.000000e+00 : f32
    %102 = vector.broadcast %cst_121 : f32 to vector<1x64xf32>
    %c0_122 = arith.constant 0 : index
    %c0_123 = arith.constant 0 : index
    %103 = vector.load %arg22[%c0_122, %c0_123] : memref<72x64xf32, #tpu.memory_space<vmem>>, vector<1x64xf32>
    tpu.vector_store %arg22[%c0_122, %c0_123], %102 {strides = array<i32>} : memref<72x64xf32, #tpu.memory_space<vmem>>, vector<1x64xf32>,
    %c17_124 = arith.constant 17 : index
    %c0_125 = arith.constant 0 : index
    %104 = vector.load %arg22[%c17_124, %c0_125] : memref<72x64xf32, #tpu.memory_space<vmem>>, vector<1x64xf32>
    tpu.vector_store %arg22[%c17_124, %c0_125], %102 {strides = array<i32>} : memref<72x64xf32, #tpu.memory_space<vmem>>, vector<1x64xf32>,
    %c1_126 = arith.constant 1 : index
    %c0_127 = arith.constant 0 : index
    %105 = vector.load %arg22[%c1_126, %c0_127] : memref<72x64xf32, #tpu.memory_space<vmem>>, vector<16x64xf32>
    tpu.vector_store %arg22[%c1_126, %c0_127], %101 {strides = array<i32>} : memref<72x64xf32, #tpu.memory_space<vmem>>, vector<16x64xf32>,
    %c0_128 = arith.constant 0 : index
    %c0_129 = arith.constant 0 : index
    %106 = vector.load %arg22[%c0_128, %c0_129] : memref<72x64xf32, #tpu.memory_space<vmem>>, vector<16x64xf32>
    %c0_130 = arith.constant 0 : index
    %c0_131 = arith.constant 0 : index
    %107 = vector.load %arg23[%c0_130, %c0_131] : memref<32x192xf32, #tpu.memory_space<vmem>>, vector<16x64xf32>
    tpu.vector_store %arg23[%c0_130, %c0_131], %106 {strides = array<i32>} : memref<32x192xf32, #tpu.memory_space<vmem>>, vector<16x64xf32>,
    %c1_132 = arith.constant 1 : index
    %c0_133 = arith.constant 0 : index
    %108 = vector.load %arg22[%c1_132, %c0_133] : memref<72x64xf32, #tpu.memory_space<vmem>>, vector<16x64xf32>
    %c0_134 = arith.constant 0 : index
    %c64_135 = arith.constant 64 : index
    %109 = vector.load %arg23[%c0_134, %c64_135] : memref<32x192xf32, #tpu.memory_space<vmem>>, vector<16x64xf32>
    tpu.vector_store %arg23[%c0_134, %c64_135], %108 {strides = array<i32>} : memref<32x192xf32, #tpu.memory_space<vmem>>, vector<16x64xf32>,
    %c2_136 = arith.constant 2 : index
    %c0_137 = arith.constant 0 : index
    %110 = vector.load %arg22[%c2_136, %c0_137] : memref<72x64xf32, #tpu.memory_space<vmem>>, vector<16x64xf32>
    %c0_138 = arith.constant 0 : index
    %c128 = arith.constant 128 : index
    %111 = vector.load %arg23[%c0_138, %c128] : memref<32x192xf32, #tpu.memory_space<vmem>>, vector<16x64xf32>
    tpu.vector_store %arg23[%c0_138, %c128], %110 {strides = array<i32>} : memref<32x192xf32, #tpu.memory_space<vmem>>, vector<16x64xf32>,
    %c0_139 = arith.constant 0 : index
    %c0_140 = arith.constant 0 : index
    %112 = vector.load %arg23[%c0_139, %c0_140] : memref<32x192xf32, #tpu.memory_space<vmem>>, vector<16x192xf32>
    %113 = arith.truncf %112 : vector<16x192xf32> to vector<16x192xbf16>
    %c0_141 = arith.constant 0 : index
    %c0_142 = arith.constant 0 : index
    %114 = vector.load %arg10[%c0_141, %c0_142] : memref<192x64xbf16, #tpu.memory_space<vmem>>, vector<192x64xbf16>
    %cst_143 = arith.constant dense<0.000000e+00> : vector<16x64xf32>
    %115 = tpu.matmul %113, %114, %cst_143 {dimension_numbers = #tpu.dot_dimension_numbers<[1], [0], [0], [1], [0, 0, 1, 1], [], []>} : vector<16x192xbf16>, vector<192x64xbf16>, vector<16x64xf32> -> vector<16x64xf32>
    %c0_144 = arith.constant 0 : index
    %c0_145 = arith.constant 0 : index
    %116 = vector.load %arg11[%c0_144, %c0_145] : memref<1x64xf32, #tpu.memory_space<vmem>>, vector<1x64xf32>
    %117 = vector.broadcast %116 : vector<1x64xf32> to vector<16x64xf32>
    %118 = arith.addf %115, %117 : vector<16x64xf32>
    %cst_146 = arith.constant 0.000000e+00 : f32
    %119 = vector.broadcast %cst_146 : f32 to vector<16x64xf32>
    %120 = arith.cmpf ogt, %118, %119 : vector<16x64xf32>
    %cst_147 = arith.constant 1.000000e-01 : f32
    %121 = vector.broadcast %cst_147 : f32 to vector<16x64xf32>
    %122 = arith.mulf %121, %118 : vector<16x64xf32>
    %123 = arith.select %120, %118, %122 : vector<16x64xi1>, vector<16x64xf32>
    %cst_148 = arith.constant 0.000000e+00 : f32
    %124 = vector.broadcast %cst_148 : f32 to vector<2x64xf32>
    %c0_149 = arith.constant 0 : index
    %c0_150 = arith.constant 0 : index
    %125 = vector.load %arg22[%c0_149, %c0_150] : memref<72x64xf32, #tpu.memory_space<vmem>>, vector<2x64xf32>
    tpu.vector_store %arg22[%c0_149, %c0_150], %124 {strides = array<i32>} : memref<72x64xf32, #tpu.memory_space<vmem>>, vector<2x64xf32>,
    %c18 = arith.constant 18 : index
    %c0_151 = arith.constant 0 : index
    %126 = vector.load %arg22[%c18, %c0_151] : memref<72x64xf32, #tpu.memory_space<vmem>>, vector<2x64xf32>
    tpu.vector_store %arg22[%c18, %c0_151], %124 {strides = array<i32>} : memref<72x64xf32, #tpu.memory_space<vmem>>, vector<2x64xf32>,
    %c2_152 = arith.constant 2 : index
    %c0_153 = arith.constant 0 : index
    %127 = vector.load %arg22[%c2_152, %c0_153] : memref<72x64xf32, #tpu.memory_space<vmem>>, vector<16x64xf32>
    tpu.vector_store %arg22[%c2_152, %c0_153], %123 {strides = array<i32>} : memref<72x64xf32, #tpu.memory_space<vmem>>, vector<16x64xf32>,
    %c0_154 = arith.constant 0 : index
    %c0_155 = arith.constant 0 : index
    %128 = vector.load %arg22[%c0_154, %c0_155] : memref<72x64xf32, #tpu.memory_space<vmem>>, vector<16x64xf32>
    %c0_156 = arith.constant 0 : index
    %c0_157 = arith.constant 0 : index
    %129 = vector.load %arg23[%c0_156, %c0_157] : memref<32x192xf32, #tpu.memory_space<vmem>>, vector<16x64xf32>
    tpu.vector_store %arg23[%c0_156, %c0_157], %128 {strides = array<i32>} : memref<32x192xf32, #tpu.memory_space<vmem>>, vector<16x64xf32>,
    %c2_158 = arith.constant 2 : index
    %c0_159 = arith.constant 0 : index
    %130 = vector.load %arg22[%c2_158, %c0_159] : memref<72x64xf32, #tpu.memory_space<vmem>>, vector<16x64xf32>
    %c0_160 = arith.constant 0 : index
    %c64_161 = arith.constant 64 : index
    %131 = vector.load %arg23[%c0_160, %c64_161] : memref<32x192xf32, #tpu.memory_space<vmem>>, vector<16x64xf32>
    tpu.vector_store %arg23[%c0_160, %c64_161], %130 {strides = array<i32>} : memref<32x192xf32, #tpu.memory_space<vmem>>, vector<16x64xf32>,
    %c4_162 = arith.constant 4 : index
    %c0_163 = arith.constant 0 : index
    %132 = vector.load %arg22[%c4_162, %c0_163] : memref<72x64xf32, #tpu.memory_space<vmem>>, vector<16x64xf32>
    %c0_164 = arith.constant 0 : index
    %c128_165 = arith.constant 128 : index
    %133 = vector.load %arg23[%c0_164, %c128_165] : memref<32x192xf32, #tpu.memory_space<vmem>>, vector<16x64xf32>
    tpu.vector_store %arg23[%c0_164, %c128_165], %132 {strides = array<i32>} : memref<32x192xf32, #tpu.memory_space<vmem>>, vector<16x64xf32>,
    %c0_166 = arith.constant 0 : index
    %c0_167 = arith.constant 0 : index
    %134 = vector.load %arg23[%c0_166, %c0_167] : memref<32x192xf32, #tpu.memory_space<vmem>>, vector<16x192xf32>
    %135 = arith.truncf %134 : vector<16x192xf32> to vector<16x192xbf16>
    %c0_168 = arith.constant 0 : index
    %c0_169 = arith.constant 0 : index
    %136 = vector.load %arg12[%c0_168, %c0_169] : memref<192x64xbf16, #tpu.memory_space<vmem>>, vector<192x64xbf16>
    %cst_170 = arith.constant dense<0.000000e+00> : vector<16x64xf32>
    %137 = tpu.matmul %135, %136, %cst_170 {dimension_numbers = #tpu.dot_dimension_numbers<[1], [0], [0], [1], [0, 0, 1, 1], [], []>} : vector<16x192xbf16>, vector<192x64xbf16>, vector<16x64xf32> -> vector<16x64xf32>
    %c0_171 = arith.constant 0 : index
    %c0_172 = arith.constant 0 : index
    %138 = vector.load %arg13[%c0_171, %c0_172] : memref<1x64xf32, #tpu.memory_space<vmem>>, vector<1x64xf32>
    %139 = vector.broadcast %138 : vector<1x64xf32> to vector<16x64xf32>
    %140 = arith.addf %137, %139 : vector<16x64xf32>
    %cst_173 = arith.constant 0.000000e+00 : f32
    %141 = vector.broadcast %cst_173 : f32 to vector<16x64xf32>
    %142 = arith.cmpf ogt, %140, %141 : vector<16x64xf32>
    %cst_174 = arith.constant 1.000000e-01 : f32
    %143 = vector.broadcast %cst_174 : f32 to vector<16x64xf32>
    %144 = arith.mulf %143, %140 : vector<16x64xf32>
    %145 = arith.select %142, %140, %144 : vector<16x64xi1>, vector<16x64xf32>
    %cst_175 = arith.constant 0.000000e+00 : f32
    %146 = vector.broadcast %cst_175 : f32 to vector<4x64xf32>
    %c0_176 = arith.constant 0 : index
    %c0_177 = arith.constant 0 : index
    %147 = vector.load %arg22[%c0_176, %c0_177] : memref<72x64xf32, #tpu.memory_space<vmem>>, vector<4x64xf32>
    tpu.vector_store %arg22[%c0_176, %c0_177], %146 {strides = array<i32>} : memref<72x64xf32, #tpu.memory_space<vmem>>, vector<4x64xf32>,
    %c20 = arith.constant 20 : index
    %c0_178 = arith.constant 0 : index
    %148 = vector.load %arg22[%c20, %c0_178] : memref<72x64xf32, #tpu.memory_space<vmem>>, vector<4x64xf32>
    tpu.vector_store %arg22[%c20, %c0_178], %146 {strides = array<i32>} : memref<72x64xf32, #tpu.memory_space<vmem>>, vector<4x64xf32>,
    %c4_179 = arith.constant 4 : index
    %c0_180 = arith.constant 0 : index
    %149 = vector.load %arg22[%c4_179, %c0_180] : memref<72x64xf32, #tpu.memory_space<vmem>>, vector<16x64xf32>
    tpu.vector_store %arg22[%c4_179, %c0_180], %145 {strides = array<i32>} : memref<72x64xf32, #tpu.memory_space<vmem>>, vector<16x64xf32>,
    %c0_181 = arith.constant 0 : index
    %c0_182 = arith.constant 0 : index
    %150 = vector.load %arg22[%c0_181, %c0_182] : memref<72x64xf32, #tpu.memory_space<vmem>>, vector<16x64xf32>
    %c0_183 = arith.constant 0 : index
    %c0_184 = arith.constant 0 : index
    %151 = vector.load %arg23[%c0_183, %c0_184] : memref<32x192xf32, #tpu.memory_space<vmem>>, vector<16x64xf32>
    tpu.vector_store %arg23[%c0_183, %c0_184], %150 {strides = array<i32>} : memref<32x192xf32, #tpu.memory_space<vmem>>, vector<16x64xf32>,
    %c4_185 = arith.constant 4 : index
    %c0_186 = arith.constant 0 : index
    %152 = vector.load %arg22[%c4_185, %c0_186] : memref<72x64xf32, #tpu.memory_space<vmem>>, vector<16x64xf32>
    %c0_187 = arith.constant 0 : index
    %c64_188 = arith.constant 64 : index
    %153 = vector.load %arg23[%c0_187, %c64_188] : memref<32x192xf32, #tpu.memory_space<vmem>>, vector<16x64xf32>
    tpu.vector_store %arg23[%c0_187, %c64_188], %152 {strides = array<i32>} : memref<32x192xf32, #tpu.memory_space<vmem>>, vector<16x64xf32>,
    %c8_189 = arith.constant 8 : index
    %c0_190 = arith.constant 0 : index
    %154 = vector.load %arg22[%c8_189, %c0_190] : memref<72x64xf32, #tpu.memory_space<vmem>>, vector<16x64xf32>
    %c0_191 = arith.constant 0 : index
    %c128_192 = arith.constant 128 : index
    %155 = vector.load %arg23[%c0_191, %c128_192] : memref<32x192xf32, #tpu.memory_space<vmem>>, vector<16x64xf32>
    tpu.vector_store %arg23[%c0_191, %c128_192], %154 {strides = array<i32>} : memref<32x192xf32, #tpu.memory_space<vmem>>, vector<16x64xf32>,
    %c0_193 = arith.constant 0 : index
    %c0_194 = arith.constant 0 : index
    %156 = vector.load %arg23[%c0_193, %c0_194] : memref<32x192xf32, #tpu.memory_space<vmem>>, vector<16x192xf32>
    %157 = arith.truncf %156 : vector<16x192xf32> to vector<16x192xbf16>
    %c0_195 = arith.constant 0 : index
    %c0_196 = arith.constant 0 : index
    %158 = vector.load %arg14[%c0_195, %c0_196] : memref<192x64xbf16, #tpu.memory_space<vmem>>, vector<192x64xbf16>
    %cst_197 = arith.constant dense<0.000000e+00> : vector<16x64xf32>
    %159 = tpu.matmul %157, %158, %cst_197 {dimension_numbers = #tpu.dot_dimension_numbers<[1], [0], [0], [1], [0, 0, 1, 1], [], []>} : vector<16x192xbf16>, vector<192x64xbf16>, vector<16x64xf32> -> vector<16x64xf32>
    %c0_198 = arith.constant 0 : index
    %c0_199 = arith.constant 0 : index
    %160 = vector.load %arg15[%c0_198, %c0_199] : memref<1x64xf32, #tpu.memory_space<vmem>>, vector<1x64xf32>
    %161 = vector.broadcast %160 : vector<1x64xf32> to vector<16x64xf32>
    %162 = arith.addf %159, %161 : vector<16x64xf32>
    %cst_200 = arith.constant 0.000000e+00 : f32
    %163 = vector.broadcast %cst_200 : f32 to vector<16x64xf32>
    %164 = arith.cmpf ogt, %162, %163 : vector<16x64xf32>
    %cst_201 = arith.constant 1.000000e-01 : f32
    %165 = vector.broadcast %cst_201 : f32 to vector<16x64xf32>
    %166 = arith.mulf %165, %162 : vector<16x64xf32>
    %167 = arith.select %164, %162, %166 : vector<16x64xi1>, vector<16x64xf32>
    %cst_202 = arith.constant 0.000000e+00 : f32
    %168 = vector.broadcast %cst_202 : f32 to vector<8x64xf32>
    %c0_203 = arith.constant 0 : index
    %c0_204 = arith.constant 0 : index
    %169 = vector.load %arg22[%c0_203, %c0_204] : memref<72x64xf32, #tpu.memory_space<vmem>>, vector<8x64xf32>
    tpu.vector_store %arg22[%c0_203, %c0_204], %168 {strides = array<i32>} : memref<72x64xf32, #tpu.memory_space<vmem>>, vector<8x64xf32>,
    %c24_205 = arith.constant 24 : index
    %c0_206 = arith.constant 0 : index
    %170 = vector.load %arg22[%c24_205, %c0_206] : memref<72x64xf32, #tpu.memory_space<vmem>>, vector<8x64xf32>
    tpu.vector_store %arg22[%c24_205, %c0_206], %168 {strides = array<i32>} : memref<72x64xf32, #tpu.memory_space<vmem>>, vector<8x64xf32>,
    %c8_207 = arith.constant 8 : index
    %c0_208 = arith.constant 0 : index
    %171 = vector.load %arg22[%c8_207, %c0_208] : memref<72x64xf32, #tpu.memory_space<vmem>>, vector<16x64xf32>
    tpu.vector_store %arg22[%c8_207, %c0_208], %167 {strides = array<i32>} : memref<72x64xf32, #tpu.memory_space<vmem>>, vector<16x64xf32>,
    %c0_209 = arith.constant 0 : index
    %c0_210 = arith.constant 0 : index
    %172 = vector.load %arg22[%c0_209, %c0_210] : memref<72x64xf32, #tpu.memory_space<vmem>>, vector<16x64xf32>
    %c0_211 = arith.constant 0 : index
    %c0_212 = arith.constant 0 : index
    %173 = vector.load %arg23[%c0_211, %c0_212] : memref<32x192xf32, #tpu.memory_space<vmem>>, vector<16x64xf32>
    tpu.vector_store %arg23[%c0_211, %c0_212], %172 {strides = array<i32>} : memref<32x192xf32, #tpu.memory_space<vmem>>, vector<16x64xf32>,
    %c8_213 = arith.constant 8 : index
    %c0_214 = arith.constant 0 : index
    %174 = vector.load %arg22[%c8_213, %c0_214] : memref<72x64xf32, #tpu.memory_space<vmem>>, vector<16x64xf32>
    %c0_215 = arith.constant 0 : index
    %c64_216 = arith.constant 64 : index
    %175 = vector.load %arg23[%c0_215, %c64_216] : memref<32x192xf32, #tpu.memory_space<vmem>>, vector<16x64xf32>
    tpu.vector_store %arg23[%c0_215, %c64_216], %174 {strides = array<i32>} : memref<32x192xf32, #tpu.memory_space<vmem>>, vector<16x64xf32>,
    %c16_217 = arith.constant 16 : index
    %c0_218 = arith.constant 0 : index
    %176 = vector.load %arg22[%c16_217, %c0_218] : memref<72x64xf32, #tpu.memory_space<vmem>>, vector<16x64xf32>
    %c0_219 = arith.constant 0 : index
    %c128_220 = arith.constant 128 : index
    %177 = vector.load %arg23[%c0_219, %c128_220] : memref<32x192xf32, #tpu.memory_space<vmem>>, vector<16x64xf32>
    tpu.vector_store %arg23[%c0_219, %c128_220], %176 {strides = array<i32>} : memref<32x192xf32, #tpu.memory_space<vmem>>, vector<16x64xf32>,
    %c0_221 = arith.constant 0 : index
    %c0_222 = arith.constant 0 : index
    %178 = vector.load %arg23[%c0_221, %c0_222] : memref<32x192xf32, #tpu.memory_space<vmem>>, vector<16x192xf32>
    %179 = arith.truncf %178 : vector<16x192xf32> to vector<16x192xbf16>
    %c0_223 = arith.constant 0 : index
    %c0_224 = arith.constant 0 : index
    %180 = vector.load %arg16[%c0_223, %c0_224] : memref<192x64xbf16, #tpu.memory_space<vmem>>, vector<192x64xbf16>
    %cst_225 = arith.constant dense<0.000000e+00> : vector<16x64xf32>
    %181 = tpu.matmul %179, %180, %cst_225 {dimension_numbers = #tpu.dot_dimension_numbers<[1], [0], [0], [1], [0, 0, 1, 1], [], []>} : vector<16x192xbf16>, vector<192x64xbf16>, vector<16x64xf32> -> vector<16x64xf32>
    %c0_226 = arith.constant 0 : index
    %c0_227 = arith.constant 0 : index
    %182 = vector.load %arg17[%c0_226, %c0_227] : memref<1x64xf32, #tpu.memory_space<vmem>>, vector<1x64xf32>
    %183 = vector.broadcast %182 : vector<1x64xf32> to vector<16x64xf32>
    %184 = arith.addf %181, %183 : vector<16x64xf32>
    %cst_228 = arith.constant 0.000000e+00 : f32
    %185 = vector.broadcast %cst_228 : f32 to vector<16x64xf32>
    %186 = arith.cmpf ogt, %184, %185 : vector<16x64xf32>
    %cst_229 = arith.constant 1.000000e-01 : f32
    %187 = vector.broadcast %cst_229 : f32 to vector<16x64xf32>
    %188 = arith.mulf %187, %184 : vector<16x64xf32>
    %189 = arith.select %186, %184, %188 : vector<16x64xi1>, vector<16x64xf32>
    %c0_230 = arith.constant 0 : index
    %c0_231 = arith.constant 0 : index
    %190 = vector.load %arg18[%c0_230, %c0_231] : memref<2x64xbf16, #tpu.memory_space<vmem>>, vector<2x64xbf16>
    %191 = arith.truncf %189 : vector<16x64xf32> to vector<16x64xbf16>
    %cst_232 = arith.constant dense<0.000000e+00> : vector<2x16xf32>
    %192 = tpu.matmul %190, %191, %cst_232 {dimension_numbers = #tpu.dot_dimension_numbers<[1], [1], [0], [0], [0, 0, 1, 0], [], []>} : vector<2x64xbf16>, vector<16x64xbf16>, vector<2x16xf32> -> vector<2x16xf32>
    %c0_233 = arith.constant 0 : index
    %c0_234 = arith.constant 0 : index
    %193 = vector.load %arg19[%c0_233, %c0_234] : memref<2x1xf32, #tpu.memory_space<vmem>>, vector<2x1xf32>
    %194 = vector.broadcast %193 : vector<2x1xf32> to vector<2x16xf32>
    %195 = arith.addf %192, %194 : vector<2x16xf32>
    %c0_235 = arith.constant 0 : index
    %c0_236 = arith.constant 0 : index
    %c0_237 = arith.constant 0 : index
    %196 = vector.load %arg20[%c0_235, %c0_236, %c0_237] : memref<1x2x16xf32, #tpu.memory_space<vmem>>, vector<1x2x16xf32>
    %197 = vector.shape_cast %196 : vector<1x2x16xf32> to vector<2x16xf32>
    %198 = vector.shape_cast %195 : vector<2x16xf32> to vector<1x2x16xf32>
    tpu.vector_store %arg20[%c0_235, %c0_236, %c0_237], %198 {strides = array<i32>} : memref<1x2x16xf32, #tpu.memory_space<vmem>>, vector<1x2x16xf32>,
    %199 = arith.negf %195 : vector<2x16xf32>
    %200 = math.exp %199 : vector<2x16xf32>
    %cst_238 = arith.constant 1.000000e+00 : f32
    %201 = vector.broadcast %cst_238 : f32 to vector<2x16xf32>
    %202 = arith.addf %201, %200 : vector<2x16xf32>
    %203 = arith.divf %201, %202 : vector<2x16xf32>
    %c0_239 = arith.constant 0 : index
    %c0_240 = arith.constant 0 : index
    %c0_241 = arith.constant 0 : index
    %204 = vector.load %arg21[%c0_239, %c0_240, %c0_241] : memref<1x2x16xf32, #tpu.memory_space<vmem>>, vector<1x2x16xf32>
    %205 = vector.shape_cast %204 : vector<1x2x16xf32> to vector<2x16xf32>
    %206 = vector.shape_cast %203 : vector<2x16xf32> to vector<1x2x16xf32>
    tpu.vector_store %arg21[%c0_239, %c0_240, %c0_241], %206 {strides = array<i32>} : memref<1x2x16xf32, #tpu.memory_space<vmem>>, vector<1x2x16xf32>,
    return
  }
  func.func @transform_0(%arg0: i32) -> (i32, i32, i32) {
    %c0_i32 = arith.constant 0 : i32
    %c0_i32_0 = arith.constant 0 : i32
    %c0_i32_1 = arith.constant 0 : i32
    return %arg0, %c0_i32, %c0_i32_0 : i32, i32, i32
  }
  func.func @transform_1(%arg0: i32) -> (i32, i32) {
    %c0_i32 = arith.constant 0 : i32
    %c0_i32_0 = arith.constant 0 : i32
    %c0_i32_1 = arith.constant 0 : i32
    return %c0_i32, %c0_i32_0 : i32, i32
  }
  func.func @transform_2(%arg0: i32) -> (i32, i32) {
    %c0_i32 = arith.constant 0 : i32
    %c0_i32_0 = arith.constant 0 : i32
    %c0_i32_1 = arith.constant 0 : i32
    return %c0_i32, %c0_i32_0 : i32, i32
  }
  func.func @transform_3(%arg0: i32) -> (i32, i32) {
    %c0_i32 = arith.constant 0 : i32
    %c0_i32_0 = arith.constant 0 : i32
    %c0_i32_1 = arith.constant 0 : i32
    return %c0_i32, %c0_i32_0 : i32, i32
  }
  func.func @transform_4(%arg0: i32) -> (i32, i32) {
    %c0_i32 = arith.constant 0 : i32
    %c0_i32_0 = arith.constant 0 : i32
    %c0_i32_1 = arith.constant 0 : i32
    return %c0_i32, %c0_i32_0 : i32, i32
  }
  func.func @transform_5(%arg0: i32) -> (i32, i32) {
    %c0_i32 = arith.constant 0 : i32
    %c0_i32_0 = arith.constant 0 : i32
    %c0_i32_1 = arith.constant 0 : i32
    return %c0_i32, %c0_i32_0 : i32, i32
  }
  func.func @transform_6(%arg0: i32) -> (i32, i32) {
    %c0_i32 = arith.constant 0 : i32
    %c0_i32_0 = arith.constant 0 : i32
    %c0_i32_1 = arith.constant 0 : i32
    return %c0_i32, %c0_i32_0 : i32, i32
  }
  func.func @transform_7(%arg0: i32) -> (i32, i32) {
    %c0_i32 = arith.constant 0 : i32
    %c0_i32_0 = arith.constant 0 : i32
    %c0_i32_1 = arith.constant 0 : i32
    return %c0_i32, %c0_i32_0 : i32, i32
  }
  func.func @transform_8(%arg0: i32) -> (i32, i32) {
    %c0_i32 = arith.constant 0 : i32
    %c0_i32_0 = arith.constant 0 : i32
    %c0_i32_1 = arith.constant 0 : i32
    return %c0_i32, %c0_i32_0 : i32, i32
  }
  func.func @transform_9(%arg0: i32) -> (i32, i32) {
    %c0_i32 = arith.constant 0 : i32
    %c0_i32_0 = arith.constant 0 : i32
    %c0_i32_1 = arith.constant 0 : i32
    return %c0_i32, %c0_i32_0 : i32, i32
  }
  func.func @transform_10(%arg0: i32) -> (i32, i32) {
    %c0_i32 = arith.constant 0 : i32
    %c0_i32_0 = arith.constant 0 : i32
    %c0_i32_1 = arith.constant 0 : i32
    return %c0_i32, %c0_i32_0 : i32, i32
  }
  func.func @transform_11(%arg0: i32) -> (i32, i32) {
    %c0_i32 = arith.constant 0 : i32
    %c0_i32_0 = arith.constant 0 : i32
    %c0_i32_1 = arith.constant 0 : i32
    return %c0_i32, %c0_i32_0 : i32, i32
  }
  func.func @transform_12(%arg0: i32) -> (i32, i32) {
    %c0_i32 = arith.constant 0 : i32
    %c0_i32_0 = arith.constant 0 : i32
    %c0_i32_1 = arith.constant 0 : i32
    return %c0_i32, %c0_i32_0 : i32, i32
  }
  func.func @transform_13(%arg0: i32) -> (i32, i32) {
    %c0_i32 = arith.constant 0 : i32
    %c0_i32_0 = arith.constant 0 : i32
    %c0_i32_1 = arith.constant 0 : i32
    return %c0_i32, %c0_i32_0 : i32, i32
  }
  func.func @transform_14(%arg0: i32) -> (i32, i32) {
    %c0_i32 = arith.constant 0 : i32
    %c0_i32_0 = arith.constant 0 : i32
    %c0_i32_1 = arith.constant 0 : i32
    return %c0_i32, %c0_i32_0 : i32, i32
  }
  func.func @transform_15(%arg0: i32) -> (i32, i32) {
    %c0_i32 = arith.constant 0 : i32
    %c0_i32_0 = arith.constant 0 : i32
    %c0_i32_1 = arith.constant 0 : i32
    return %c0_i32, %c0_i32_0 : i32, i32
  }
  func.func @transform_16(%arg0: i32) -> (i32, i32) {
    %c0_i32 = arith.constant 0 : i32
    %c0_i32_0 = arith.constant 0 : i32
    %c0_i32_1 = arith.constant 0 : i32
    return %c0_i32, %c0_i32_0 : i32, i32
  }
  func.func @transform_17(%arg0: i32) -> (i32, i32) {
    %c0_i32 = arith.constant 0 : i32
    %c0_i32_0 = arith.constant 0 : i32
    %c0_i32_1 = arith.constant 0 : i32
    return %c0_i32, %c0_i32_0 : i32, i32
  }
  func.func @transform_18(%arg0: i32) -> (i32, i32) {
    %c0_i32 = arith.constant 0 : i32
    %c0_i32_0 = arith.constant 0 : i32
    %c0_i32_1 = arith.constant 0 : i32
    return %c0_i32, %c0_i32_0 : i32, i32
  }
  func.func @transform_19(%arg0: i32) -> (i32, i32, i32) {
    %c0_i32 = arith.constant 0 : i32
    %c0_i32_0 = arith.constant 0 : i32
    %c0_i32_1 = arith.constant 0 : i32
    return %arg0, %c0_i32, %c0_i32_0 : i32, i32, i32
  }
  func.func @transform_20(%arg0: i32) -> (i32, i32, i32) {
    %c0_i32 = arith.constant 0 : i32
    %c0_i32_0 = arith.constant 0 : i32
    %c0_i32_1 = arith.constant 0 : i32
    return %arg0, %c0_i32, %c0_i32_0 : i32, i32, i32
  }
}

</mosaic_0001>

<llo_original>
// kernel: forward.1
$region0: #{forward.1}
  #allocation0 [shape = 'u32[]', space=smem, size = 0x4, offset = 0x4, fixed_abs, tag = 'smem constant byte address 0x4 - core index']
  #allocation1 [shape = 'u32[144,128]{1,0:T(1,128)}', space=vmem, size = 0x12000, scoped, tag = 'internal scratch']
  #allocation2 [shape = 'f32[72,64]{1,0:T(8,128)}', space=vmem, size = 0x9000, scoped, tag = 'scratch operand']
  #allocation3 [shape = 'f32[32,192]{1,0:T(8,128)}', space=vmem, size = 0x8000, scoped, tag = 'scratch operand']
  %s0 = inlined_call_operand.vmem [shape: f32[2,64,8], index: 0, kind: input, shape index: {}]
  %s1 = inlined_call_operand.hbm [shape: bf16[56,8], index: 1, kind: input, shape index: {}]
  %s2 = inlined_call_operand.vmem [shape: f32[1,8], index: 2, kind: input, shape index: {}]
  %s3 = inlined_call_operand.hbm [shape: bf16[40,16], index: 3, kind: input, shape index: {}]
  %s4 = inlined_call_operand.vmem [shape: f32[1,16], index: 4, kind: input, shape index: {}]
  %s5 = inlined_call_operand.vmem [shape: bf16[48,32], index: 5, kind: input, shape index: {}]
  %s6 = inlined_call_operand.vmem [shape: f32[1,32], index: 6, kind: input, shape index: {}]
  %s7 = inlined_call_operand.vmem [shape: bf16[96,64], index: 7, kind: input, shape index: {}]
  %s8 = inlined_call_operand.vmem [shape: f32[1,64], index: 8, kind: input, shape index: {}, may-alias: {8,10,12,14,16}]
  %s9 = inlined_call_operand.vmem [shape: bf16[192,64], index: 9, kind: input, shape index: {}]
  %s10 = inlined_call_operand.vmem [shape: f32[1,64], index: 10, kind: input, shape index: {}, may-alias: {8,10,12,14,16}]
  %s11 = inlined_call_operand.vmem [shape: bf16[192,64], index: 11, kind: input, shape index: {}]
  %s12 = inlined_call_operand.vmem [shape: f32[1,64], index: 12, kind: input, shape index: {}, may-alias: {8,10,12,14,16}]
  %s13 = inlined_call_operand.vmem [shape: bf16[192,64], index: 13, kind: input, shape index: {}]
  %s14 = inlined_call_operand.vmem [shape: f32[1,64], index: 14, kind: input, shape index: {}, may-alias: {8,10,12,14,16}]
  %s15 = inlined_call_operand.vmem [shape: bf16[192,64], index: 15, kind: input, shape index: {}]
  %s16 = inlined_call_operand.vmem [shape: f32[1,64], index: 16, kind: input, shape index: {}, may-alias: {8,10,12,14,16}]
  %s17 = inlined_call_operand.vmem [shape: bf16[2,64], index: 17, kind: input, shape index: {}]
  %s18 = inlined_call_operand.vmem [shape: f32[2,1], index: 18, kind: input, shape index: {}]
  %s19 = inlined_call_operand.vmem [shape: f32[2,2,16], index: 19, kind: output, shape index: {0}]
  %s20 = inlined_call_operand.vmem [shape: f32[2,2,16], index: 20, kind: output, shape index: {1}]
  %21 = xla_tuple %s19, %s20
  %s22 = sld [smem:[#allocation0]]
  $region125: #{forward.1} parent=0
    _
  %s24 = ssub.s32 1, %s22
  %s25 = scalar_select 0, %s24, %s22
  $region1: #{forward.1} parent=0
    #allocation4 [shape = 'u8[14336]{0}', space=vmem, size = 0x3800, scoped, tag = 'input window, operand 1, single buffered']
    #allocation5 [shape = 's32[2]{0}', space=sflag, size = 0x8, scoped, tag = 'scoped memory for forward.1']
    #allocation6 [shape = 'u8[10240]{0}', space=vmem, size = 0x2800, scoped, tag = 'input window, operand 3, single buffered']
    #allocation7 [shape = 's32[1]{0}', space=sflag, size = 0x4, scoped, tag = 'scoped memory for forward.1']
    %26 = vsyncpa [#allocation5], 0
    %27 = vsyncpa [#allocation7], 0
    loop: start=0, step=1, limit=4
    $region2: #{forward.1} parent=1 // loop_pre_header
      _
    $region3: #{forward.1} parent=1 // loop_header
      %s29 = sphi 0, %s33
      %p30 = scmp.ge.s32.totalorder %s29, 4
      %s39 = sphi 0, %s41
      %s42 = sphi 0, %s39
      %s43 = sphi 0, %s42
      %s59 = sphi 0, %s43
      %s63 = sphi 0, %s63
      %s65 = sphi 0, %s63
      %s66 = sphi 0, %s65
      %s80 = sphi 0, %s66
      %s84 = sphi 0, %s84
      %s86 = sphi 0, %s84
      %s87 = sphi 0, %s86
      %s101 = sphi 0, %s87
      %s105 = sphi 0, %s105
      %s107 = sphi 0, %s105
      %s108 = sphi 0, %s107
      %s122 = sphi 0, %s108
      %s126 = sphi 0, %s126
      %s128 = sphi 0, %s126
      %s129 = sphi 0, %s128
      %s143 = sphi 0, %s129
      %s147 = sphi 0, %s147
      %s149 = sphi 0, %s147
      %s150 = sphi 0, %s149
      %s164 = sphi 0, %s150
      %s168 = sphi 0, %s168
      %s170 = sphi 0, %s168
      %s171 = sphi 0, %s170
      %s185 = sphi 0, %s171
      %s189 = sphi 0, %s189
      %s191 = sphi 0, %s189
      %s192 = sphi 0, %s191
      %s206 = sphi 0, %s192
      %s210 = sphi 0, %s210
      %s212 = sphi 0, %s210
      %s213 = sphi 0, %s212
      %s227 = sphi 0, %s213
      %s231 = sphi 0, %s231
      %s233 = sphi 0, %s231
      %s234 = sphi 0, %s233
      %s248 = sphi 0, %s234
      %s252 = sphi 0, %s252
      %s254 = sphi 0, %s252
      %s255 = sphi 0, %s254
      %s269 = sphi 0, %s255
      %s273 = sphi 0, %s273
      %s275 = sphi 0, %s273
      %s276 = sphi 0, %s275
      %s290 = sphi 0, %s276
      %s294 = sphi 0, %s294
      %s296 = sphi 0, %s294
      %s297 = sphi 0, %s296
      %s311 = sphi 0, %s297
      %s315 = sphi 0, %s315
      %s317 = sphi 0, %s315
      %s318 = sphi 0, %s317
      %s332 = sphi 0, %s318
      %s336 = sphi 0, %s336
      %s338 = sphi 0, %s336
      %s339 = sphi 0, %s338
      %s353 = sphi 0, %s339
      %s357 = sphi 0, %s357
      %s359 = sphi 0, %s357
      %s360 = sphi 0, %s359
      %s374 = sphi 0, %s360
      %s378 = sphi 0, %s378
      %s380 = sphi 0, %s378
      %s381 = sphi 0, %s380
      %s395 = sphi 0, %s381
      %s399 = sphi 0, %s399
      %s401 = sphi 0, %s399
      %s402 = sphi 0, %s401
      %s416 = sphi 0, %s402
      %s420 = sphi 0, %s420
      %s422 = sphi 0, %s420
      %s423 = sphi 0, %s422
      %s437 = sphi 0, %s423
      %s443 = sphi 0, %s445
      %s446 = sphi 0, %s443
      %s447 = sphi 0, %s446
      %s463 = sphi 0, %s447
      %s469 = sphi 0, %s471
      %s472 = sphi 0, %s469
      %s473 = sphi 0, %s472
      %s489 = sphi 0, %s473
    $region4: #{forward.1} parent=1 // loop_header_branch
      %32 = sbr.rel (%p30) target = $region8
    $region5: #{forward.1} parent=1 // loop_body
      %s34 = ssub.s32 %s29, 1
      %s35 = ssub.s32 %s29, 2
      %s36 = sadd.s32 %s29, 1
      %s37 = ssub.s32 %s29, %s36
      %p38 = scmp.eq.s32.totalorder %s37, 0
      %s40 = sadd.s32 %s39, 1
      %s41 = scalar_select %p38, %s39, %s40
      %p44 = pneg %p38
      %p45 = scmp.eq.s32.totalorder %s29, 1
      %p46 = por %p44, %p45
      %p47 = scmp.ne.s32.totalorder %s39, %s42
      %p48 = scmp.eq.s32.totalorder %s29, 0
      %p49 = por %p47, %p48
      %p50 = scmp.ne.s32.totalorder %s39, %s42
      %p51 = scmp.eq.s32.totalorder %s34, 1
      %p52 = por %p50, %p51
      %p53 = scmp.ne.s32.totalorder %s42, %s43
      %p54 = scmp.eq.s32.totalorder %s34, 0
      %p55 = por %p53, %p54
      %p56 = scmp.ne.s32.totalorder %s42, %s43
      %p57 = scmp.eq.s32.totalorder %s35, 1
      %p58 = por %p56, %p57
      %p60 = scmp.ne.s32.totalorder %s43, %s59
      %p61 = scmp.eq.s32.totalorder %s35, 0
      %p62 = por %p60, %p61
      %s64 = sadd.s32 %s63, 1
      %p67 = scmp.eq.s32.totalorder %s29, 1
      %p68 = scmp.ne.s32.totalorder %s63, %s65
      %p69 = scmp.eq.s32.totalorder %s29, 0
      %p70 = por %p68, %p69
      %p71 = scmp.ne.s32.totalorder %s63, %s65
      %p72 = scmp.eq.s32.totalorder %s34, 1
      %p73 = por %p71, %p72
      %p74 = scmp.ne.s32.totalorder %s65, %s66
      %p75 = scmp.eq.s32.totalorder %s34, 0
      %p76 = por %p74, %p75
      %p77 = scmp.ne.s32.totalorder %s65, %s66
      %p78 = scmp.eq.s32.totalorder %s35, 1
      %p79 = por %p77, %p78
      %p81 = scmp.ne.s32.totalorder %s66, %s80
      %p82 = scmp.eq.s32.totalorder %s35, 0
      %p83 = por %p81, %p82
      %s85 = sadd.s32 %s84, 1
      %p88 = scmp.eq.s32.totalorder %s29, 1
      %p89 = scmp.ne.s32.totalorder %s84, %s86
      %p90 = scmp.eq.s32.totalorder %s29, 0
      %p91 = por %p89, %p90
      %p92 = scmp.ne.s32.totalorder %s84, %s86
      %p93 = scmp.eq.s32.totalorder %s34, 1
      %p94 = por %p92, %p93
      %p95 = scmp.ne.s32.totalorder %s86, %s87
      %p96 = scmp.eq.s32.totalorder %s34, 0
      %p97 = por %p95, %p96
      %p98 = scmp.ne.s32.totalorder %s86, %s87
      %p99 = scmp.eq.s32.totalorder %s35, 1
      %p100 = por %p98, %p99
      %p102 = scmp.ne.s32.totalorder %s87, %s101
      %p103 = scmp.eq.s32.totalorder %s35, 0
      %p104 = por %p102, %p103
      %s106 = sadd.s32 %s105, 1
      %p109 = scmp.eq.s32.totalorder %s29, 1
      %p110 = scmp.ne.s32.totalorder %s105, %s107
      %p111 = scmp.eq.s32.totalorder %s29, 0
      %p112 = por %p110, %p111
      %p113 = scmp.ne.s32.totalorder %s105, %s107
      %p114 = scmp.eq.s32.totalorder %s34, 1
      %p115 = por %p113, %p114
      %p116 = scmp.ne.s32.totalorder %s107, %s108
      %p117 = scmp.eq.s32.totalorder %s34, 0
      %p118 = por %p116, %p117
      %p119 = scmp.ne.s32.totalorder %s107, %s108
      %p120 = scmp.eq.s32.totalorder %s35, 1
      %p121 = por %p119, %p120
      %p123 = scmp.ne.s32.totalorder %s108, %s122
      %p124 = scmp.eq.s32.totalorder %s35, 0
      %p125 = por %p123, %p124
      %s127 = sadd.s32 %s126, 1
      %p130 = scmp.eq.s32.totalorder %s29, 1
      %p131 = scmp.ne.s32.totalorder %s126, %s128
      %p132 = scmp.eq.s32.totalorder %s29, 0
      %p133 = por %p131, %p132
      %p134 = scmp.ne.s32.totalorder %s126, %s128
      %p135 = scmp.eq.s32.totalorder %s34, 1
      %p136 = por %p134, %p135
      %p137 = scmp.ne.s32.totalorder %s128, %s129
      %p138 = scmp.eq.s32.totalorder %s34, 0
      %p139 = por %p137, %p138
      %p140 = scmp.ne.s32.totalorder %s128, %s129
      %p141 = scmp.eq.s32.totalorder %s35, 1
      %p142 = por %p140, %p141
      %p144 = scmp.ne.s32.totalorder %s129, %s143
      %p145 = scmp.eq.s32.totalorder %s35, 0
      %p146 = por %p144, %p145
      %s148 = sadd.s32 %s147, 1
      %p151 = scmp.eq.s32.totalorder %s29, 1
      %p152 = scmp.ne.s32.totalorder %s147, %s149
      %p153 = scmp.eq.s32.totalorder %s29, 0
      %p154 = por %p152, %p153
      %p155 = scmp.ne.s32.totalorder %s147, %s149
      %p156 = scmp.eq.s32.totalorder %s34, 1
      %p157 = por %p155, %p156
      %p158 = scmp.ne.s32.totalorder %s149, %s150
      %p159 = scmp.eq.s32.totalorder %s34, 0
      %p160 = por %p158, %p159
      %p161 = scmp.ne.s32.totalorder %s149, %s150
      %p162 = scmp.eq.s32.totalorder %s35, 1
      %p163 = por %p161, %p162
      %p165 = scmp.ne.s32.totalorder %s150, %s164
      %p166 = scmp.eq.s32.totalorder %s35, 0
      %p167 = por %p165, %p166
      %s169 = sadd.s32 %s168, 1
      %p172 = scmp.eq.s32.totalorder %s29, 1
      %p173 = scmp.ne.s32.totalorder %s168, %s170
      %p174 = scmp.eq.s32.totalorder %s29, 0
      %p175 = por %p173, %p174
      %p176 = scmp.ne.s32.totalorder %s168, %s170
      %p177 = scmp.eq.s32.totalorder %s34, 1
      %p178 = por %p176, %p177
      %p179 = scmp.ne.s32.totalorder %s170, %s171
      %p180 = scmp.eq.s32.totalorder %s34, 0
      %p181 = por %p179, %p180
      %p182 = scmp.ne.s32.totalorder %s170, %s171
      %p183 = scmp.eq.s32.totalorder %s35, 1
      %p184 = por %p182, %p183
      %p186 = scmp.ne.s32.totalorder %s171, %s185
      %p187 = scmp.eq.s32.totalorder %s35, 0
      %p188 = por %p186, %p187
      %s190 = sadd.s32 %s189, 1
      %p193 = scmp.eq.s32.totalorder %s29, 1
      %p194 = scmp.ne.s32.totalorder %s189, %s191
      %p195 = scmp.eq.s32.totalorder %s29, 0
      %p196 = por %p194, %p195
      %p197 = scmp.ne.s32.totalorder %s189, %s191
      %p198 = scmp.eq.s32.totalorder %s34, 1
      %p199 = por %p197, %p198
      %p200 = scmp.ne.s32.totalorder %s191, %s192
      %p201 = scmp.eq.s32.totalorder %s34, 0
      %p202 = por %p200, %p201
      %p203 = scmp.ne.s32.totalorder %s191, %s192
      %p204 = scmp.eq.s32.totalorder %s35, 1
      %p205 = por %p203, %p204
      %p207 = scmp.ne.s32.totalorder %s192, %s206
      %p208 = scmp.eq.s32.totalorder %s35, 0
      %p209 = por %p207, %p208
      %s211 = sadd.s32 %s210, 1
      %p214 = scmp.eq.s32.totalorder %s29, 1
      %p215 = scmp.ne.s32.totalorder %s210, %s212
      %p216 = scmp.eq.s32.totalorder %s29, 0
      %p217 = por %p215, %p216
      %p218 = scmp.ne.s32.totalorder %s210, %s212
      %p219 = scmp.eq.s32.totalorder %s34, 1
      %p220 = por %p218, %p219
      %p221 = scmp.ne.s32.totalorder %s212, %s213
      %p222 = scmp.eq.s32.totalorder %s34, 0
      %p223 = por %p221, %p222
      %p224 = scmp.ne.s32.totalorder %s212, %s213
      %p225 = scmp.eq.s32.totalorder %s35, 1
      %p226 = por %p224, %p225
      %p228 = scmp.ne.s32.totalorder %s213, %s227
      %p229 = scmp.eq.s32.totalorder %s35, 0
      %p230 = por %p228, %p229
      %s232 = sadd.s32 %s231, 1
      %p235 = scmp.eq.s32.totalorder %s29, 1
      %p236 = scmp.ne.s32.totalorder %s231, %s233
      %p237 = scmp.eq.s32.totalorder %s29, 0
      %p238 = por %p236, %p237
      %p239 = scmp.ne.s32.totalorder %s231, %s233
      %p240 = scmp.eq.s32.totalorder %s34, 1
      %p241 = por %p239, %p240
      %p242 = scmp.ne.s32.totalorder %s233, %s234
      %p243 = scmp.eq.s32.totalorder %s34, 0
      %p244 = por %p242, %p243
      %p245 = scmp.ne.s32.totalorder %s233, %s234
      %p246 = scmp.eq.s32.totalorder %s35, 1
      %p247 = por %p245, %p246
      %p249 = scmp.ne.s32.totalorder %s234, %s248
      %p250 = scmp.eq.s32.totalorder %s35, 0
      %p251 = por %p249, %p250
      %s253 = sadd.s32 %s252, 1
      %p256 = scmp.eq.s32.totalorder %s29, 1
      %p257 = scmp.ne.s32.totalorder %s252, %s254
      %p258 = scmp.eq.s32.totalorder %s29, 0
      %p259 = por %p257, %p258
      %p260 = scmp.ne.s32.totalorder %s252, %s254
      %p261 = scmp.eq.s32.totalorder %s34, 1
      %p262 = por %p260, %p261
      %p263 = scmp.ne.s32.totalorder %s254, %s255
      %p264 = scmp.eq.s32.totalorder %s34, 0
      %p265 = por %p263, %p264
      %p266 = scmp.ne.s32.totalorder %s254, %s255
      %p267 = scmp.eq.s32.totalorder %s35, 1
      %p268 = por %p266, %p267
      %p270 = scmp.ne.s32.totalorder %s255, %s269
      %p271 = scmp.eq.s32.totalorder %s35, 0
      %p272 = por %p270, %p271
      %s274 = sadd.s32 %s273, 1
      %p277 = scmp.eq.s32.totalorder %s29, 1
      %p278 = scmp.ne.s32.totalorder %s273, %s275
      %p279 = scmp.eq.s32.totalorder %s29, 0
      %p280 = por %p278, %p279
      %p281 = scmp.ne.s32.totalorder %s273, %s275
      %p282 = scmp.eq.s32.totalorder %s34, 1
      %p283 = por %p281, %p282
      %p284 = scmp.ne.s32.totalorder %s275, %s276
      %p285 = scmp.eq.s32.totalorder %s34, 0
      %p286 = por %p284, %p285
      %p287 = scmp.ne.s32.totalorder %s275, %s276
      %p288 = scmp.eq.s32.totalorder %s35, 1
      %p289 = por %p287, %p288
      %p291 = scmp.ne.s32.totalorder %s276, %s290
      %p292 = scmp.eq.s32.totalorder %s35, 0
      %p293 = por %p291, %p292
      %s295 = sadd.s32 %s294, 1
      %p298 = scmp.eq.s32.totalorder %s29, 1
      %p299 = scmp.ne.s32.totalorder %s294, %s296
      %p300 = scmp.eq.s32.totalorder %s29, 0
      %p301 = por %p299, %p300
      %p302 = scmp.ne.s32.totalorder %s294, %s296
      %p303 = scmp.eq.s32.totalorder %s34, 1
      %p304 = por %p302, %p303
      %p305 = scmp.ne.s32.totalorder %s296, %s297
      %p306 = scmp.eq.s32.totalorder %s34, 0
      %p307 = por %p305, %p306
      %p308 = scmp.ne.s32.totalorder %s296, %s297
      %p309 = scmp.eq.s32.totalorder %s35, 1
      %p310 = por %p308, %p309
      %p312 = scmp.ne.s32.totalorder %s297, %s311
      %p313 = scmp.eq.s32.totalorder %s35, 0
      %p314 = por %p312, %p313
      %s316 = sadd.s32 %s315, 1
      %p319 = scmp.eq.s32.totalorder %s29, 1
      %p320 = scmp.ne.s32.totalorder %s315, %s317
      %p321 = scmp.eq.s32.totalorder %s29, 0
      %p322 = por %p320, %p321
      %p323 = scmp.ne.s32.totalorder %s315, %s317
      %p324 = scmp.eq.s32.totalorder %s34, 1
      %p325 = por %p323, %p324
      %p326 = scmp.ne.s32.totalorder %s317, %s318
      %p327 = scmp.eq.s32.totalorder %s34, 0
      %p328 = por %p326, %p327
      %p329 = scmp.ne.s32.totalorder %s317, %s318
      %p330 = scmp.eq.s32.totalorder %s35, 1
      %p331 = por %p329, %p330
      %p333 = scmp.ne.s32.totalorder %s318, %s332
      %p334 = scmp.eq.s32.totalorder %s35, 0
      %p335 = por %p333, %p334
      %s337 = sadd.s32 %s336, 1
      %p340 = scmp.eq.s32.totalorder %s29, 1
      %p341 = scmp.ne.s32.totalorder %s336, %s338
      %p342 = scmp.eq.s32.totalorder %s29, 0
      %p343 = por %p341, %p342
      %p344 = scmp.ne.s32.totalorder %s336, %s338
      %p345 = scmp.eq.s32.totalorder %s34, 1
      %p346 = por %p344, %p345
      %p347 = scmp.ne.s32.totalorder %s338, %s339
      %p348 = scmp.eq.s32.totalorder %s34, 0
      %p349 = por %p347, %p348
      %p350 = scmp.ne.s32.totalorder %s338, %s339
      %p351 = scmp.eq.s32.totalorder %s35, 1
      %p352 = por %p350, %p351
      %p354 = scmp.ne.s32.totalorder %s339, %s353
      %p355 = scmp.eq.s32.totalorder %s35, 0
      %p356 = por %p354, %p355
      %s358 = sadd.s32 %s357, 1
      %p361 = scmp.eq.s32.totalorder %s29, 1
      %p362 = scmp.ne.s32.totalorder %s357, %s359
      %p363 = scmp.eq.s32.totalorder %s29, 0
      %p364 = por %p362, %p363
      %p365 = scmp.ne.s32.totalorder %s357, %s359
      %p366 = scmp.eq.s32.totalorder %s34, 1
      %p367 = por %p365, %p366
      %p368 = scmp.ne.s32.totalorder %s359, %s360
      %p369 = scmp.eq.s32.totalorder %s34, 0
      %p370 = por %p368, %p369
      %p371 = scmp.ne.s32.totalorder %s359, %s360
      %p372 = scmp.eq.s32.totalorder %s35, 1
      %p373 = por %p371, %p372
      %p375 = scmp.ne.s32.totalorder %s360, %s374
      %p376 = scmp.eq.s32.totalorder %s35, 0
      %p377 = por %p375, %p376
      %s379 = sadd.s32 %s378, 1
      %p382 = scmp.eq.s32.totalorder %s29, 1
      %p383 = scmp.ne.s32.totalorder %s378, %s380
      %p384 = scmp.eq.s32.totalorder %s29, 0
      %p385 = por %p383, %p384
      %p386 = scmp.ne.s32.totalorder %s378, %s380
      %p387 = scmp.eq.s32.totalorder %s34, 1
      %p388 = por %p386, %p387
      %p389 = scmp.ne.s32.totalorder %s380, %s381
      %p390 = scmp.eq.s32.totalorder %s34, 0
      %p391 = por %p389, %p390
      %p392 = scmp.ne.s32.totalorder %s380, %s381
      %p393 = scmp.eq.s32.totalorder %s35, 1
      %p394 = por %p392, %p393
      %p396 = scmp.ne.s32.totalorder %s381, %s395
      %p397 = scmp.eq.s32.totalorder %s35, 0
      %p398 = por %p396, %p397
      %s400 = sadd.s32 %s399, 1
      %p403 = scmp.eq.s32.totalorder %s29, 1
      %p404 = scmp.ne.s32.totalorder %s399, %s401
      %p405 = scmp.eq.s32.totalorder %s29, 0
      %p406 = por %p404, %p405
      %p407 = scmp.ne.s32.totalorder %s399, %s401
      %p408 = scmp.eq.s32.totalorder %s34, 1
      %p409 = por %p407, %p408
      %p410 = scmp.ne.s32.totalorder %s401, %s402
      %p411 = scmp.eq.s32.totalorder %s34, 0
      %p412 = por %p410, %p411
      %p413 = scmp.ne.s32.totalorder %s401, %s402
      %p414 = scmp.eq.s32.totalorder %s35, 1
      %p415 = por %p413, %p414
      %p417 = scmp.ne.s32.totalorder %s402, %s416
      %p418 = scmp.eq.s32.totalorder %s35, 0
      %p419 = por %p417, %p418
      %s421 = sadd.s32 %s420, 1
      %p424 = scmp.eq.s32.totalorder %s29, 1
      %p425 = scmp.ne.s32.totalorder %s420, %s422
      %p426 = scmp.eq.s32.totalorder %s29, 0
      %p427 = por %p425, %p426
      %p428 = scmp.ne.s32.totalorder %s420, %s422
      %p429 = scmp.eq.s32.totalorder %s34, 1
      %p430 = por %p428, %p429
      %p431 = scmp.ne.s32.totalorder %s422, %s423
      %p432 = scmp.eq.s32.totalorder %s34, 0
      %p433 = por %p431, %p432
      %p434 = scmp.ne.s32.totalorder %s422, %s423
      %p435 = scmp.eq.s32.totalorder %s35, 1
      %p436 = por %p434, %p435
      %p438 = scmp.ne.s32.totalorder %s423, %s437
      %p439 = scmp.eq.s32.totalorder %s35, 0
      %p440 = por %p438, %p439
      %s441 = ssub.s32 %s29, %s36
      %p442 = scmp.eq.s32.totalorder %s441, 0
      %s444 = sadd.s32 %s443, 1
      %s445 = scalar_select %p442, %s443, %s444
      %p448 = pneg %p442
      %p449 = scmp.eq.s32.totalorder %s29, 1
      %p450 = por %p448, %p449
      %p451 = scmp.ne.s32.totalorder %s443, %s446
      %p452 = scmp.eq.s32.totalorder %s29, 0
      %p453 = por %p451, %p452
      %p454 = scmp.ne.s32.totalorder %s443, %s446
      %p455 = scmp.eq.s32.totalorder %s34, 1
      %p456 = por %p454, %p455
      %p457 = scmp.ne.s32.totalorder %s446, %s447
      %p458 = scmp.eq.s32.totalorder %s34, 0
      %p459 = por %p457, %p458
      %p460 = scmp.ne.s32.totalorder %s446, %s447
      %p461 = scmp.eq.s32.totalorder %s35, 1
      %p462 = por %p460, %p461
      %p464 = scmp.ne.s32.totalorder %s447, %s463
      %p465 = scmp.eq.s32.totalorder %s35, 0
      %p466 = por %p464, %p465
      %s467 = ssub.s32 %s29, %s36
      %p468 = scmp.eq.s32.totalorder %s467, 0
      %s470 = sadd.s32 %s469, 1
      %s471 = scalar_select %p468, %s469, %s470
      %p474 = pneg %p468
      %p475 = scmp.eq.s32.totalorder %s29, 1
      %p476 = por %p474, %p475
      %p477 = scmp.ne.s32.totalorder %s469, %s472
      %p478 = scmp.eq.s32.totalorder %s29, 0
      %p479 = por %p477, %p478
      %p480 = scmp.ne.s32.totalorder %s469, %s472
      %p481 = scmp.eq.s32.totalorder %s34, 1
      %p482 = por %p480, %p481
      %p483 = scmp.ne.s32.totalorder %s472, %s473
      %p484 = scmp.eq.s32.totalorder %s34, 0
      %p485 = por %p483, %p484
      %p486 = scmp.ne.s32.totalorder %s472, %s473
      %p487 = scmp.eq.s32.totalorder %s35, 1
      %p488 = por %p486, %p487
      %p490 = scmp.ne.s32.totalorder %s473, %s489
      %p491 = scmp.eq.s32.totalorder %s35, 0
      %p492 = por %p490, %p491
      %p493 = scmp.le.s32.totalorder 1, %s29
      %p494 = scmp.lt.s32.totalorder %s29, 3
      %p495 = pnand %p493, %p494
      %p496 = pneg %p495
      // Predicated region
      $region9: #{forward.1} parent=5 // pred_check
        _
      $region10: #{forward.1} parent=5 // pred_check_branch
        %498 = sbr.rel (%p495) target = $region12
      $region11: #{forward.1} parent=5 // pred_region
        %s499 = ssub.s32 %s29, 1
        // Predicated region
        $region13: #{forward.1} parent=11 // pred_check
          %p500 = pneg %p76
        $region14: #{forward.1} parent=11 // pred_check_branch
          %502 = sbr.rel (%p500) target = $region16
        $region15: #{forward.1} parent=11 // pred_region
          %s504 = ssub.s32 448, 448
          %505 = vsyncadd [#allocation5], %s504
          %s506 = sshll.u32 [#allocation4], 4
          %s507 = int_to_ptr.vmem [resolvable:$true] %s506
          %512 = dma.hbm_to_vmem [thread:$0]  %s1, 448, %s507, [#allocation5], 64, 64, 4
        $region16: #{forward.1} parent=11 // pred_fallthru
          _
        // Predicated region
        $region17: #{forward.1} parent=11 // pred_check
          %p513 = pneg %p97
        $region18: #{forward.1} parent=11 // pred_check_branch
          %515 = sbr.rel (%p513) target = $region20
        $region19: #{forward.1} parent=11 // pred_region
          _
        $region20: #{forward.1} parent=11 // pred_fallthru
          _
        // Predicated region
        $region21: #{forward.1} parent=11 // pred_check
          %p516 = pneg %p118
        $region22: #{forward.1} parent=11 // pred_check_branch
          %518 = sbr.rel (%p516) target = $region24
        $region23: #{forward.1} parent=11 // pred_region
          %s520 = ssub.s32 320, 320
          %521 = vsyncadd [#allocation7], %s520
          %s522 = sshll.u32 [#allocation6], 4
          %s523 = int_to_ptr.vmem [resolvable:$true] %s522
          %528 = dma.hbm_to_vmem [thread:$0]  %s3, 320, %s523, [#allocation7], 64, 64, 4
        $region24: #{forward.1} parent=11 // pred_fallthru
          _
        // Predicated region
        $region25: #{forward.1} parent=11 // pred_check
          %p529 = pneg %p139
        $region26: #{forward.1} parent=11 // pred_check_branch
          %531 = sbr.rel (%p529) target = $region28
        $region27: #{forward.1} parent=11 // pred_region
          _
        $region28: #{forward.1} parent=11 // pred_fallthru
          _
        // Predicated region
        $region29: #{forward.1} parent=11 // pred_check
          %p532 = pneg %p160
        $region30: #{forward.1} parent=11 // pred_check_branch
          %534 = sbr.rel (%p532) target = $region32
        $region31: #{forward.1} parent=11 // pred_region
          _
        $region32: #{forward.1} parent=11 // pred_fallthru
          _
        // Predicated region
        $region33: #{forward.1} parent=11 // pred_check
          %p535 = pneg %p181
        $region34: #{forward.1} parent=11 // pred_check_branch
          %537 = sbr.rel (%p535) target = $region36
        $region35: #{forward.1} parent=11 // pred_region
          _
        $region36: #{forward.1} parent=11 // pred_fallthru
          _
        // Predicated region
        $region37: #{forward.1} parent=11 // pred_check
          %p538 = pneg %p202
        $region38: #{forward.1} parent=11 // pred_check_branch
          %540 = sbr.rel (%p538) target = $region40
        $region39: #{forward.1} parent=11 // pred_region
          _
        $region40: #{forward.1} parent=11 // pred_fallthru
          _
        // Predicated region
        $region41: #{forward.1} parent=11 // pred_check
          %p541 = pneg %p223
        $region42: #{forward.1} parent=11 // pred_check_branch
          %543 = sbr.rel (%p541) target = $region44
        $region43: #{forward.1} parent=11 // pred_region
          _
        $region44: #{forward.1} parent=11 // pred_fallthru
          _
        // Predicated region
        $region45: #{forward.1} parent=11 // pred_check
          %p544 = pneg %p244
        $region46: #{forward.1} parent=11 // pred_check_branch
          %546 = sbr.rel (%p544) target = $region48
        $region47: #{forward.1} parent=11 // pred_region
          _
        $region48: #{forward.1} parent=11 // pred_fallthru
          _
        // Predicated region
        $region49: #{forward.1} parent=11 // pred_check
          %p547 = pneg %p265
        $region50: #{forward.1} parent=11 // pred_check_branch
          %549 = sbr.rel (%p547) target = $region52
        $region51: #{forward.1} parent=11 // pred_region
          _
        $region52: #{forward.1} parent=11 // pred_fallthru
          _
        // Predicated region
        $region53: #{forward.1} parent=11 // pred_check
          %p550 = pneg %p286
        $region54: #{forward.1} parent=11 // pred_check_branch
          %552 = sbr.rel (%p550) target = $region56
        $region55: #{forward.1} parent=11 // pred_region
          _
        $region56: #{forward.1} parent=11 // pred_fallthru
          _
        // Predicated region
        $region57: #{forward.1} parent=11 // pred_check
          %p553 = pneg %p307
        $region58: #{forward.1} parent=11 // pred_check_branch
          %555 = sbr.rel (%p553) target = $region60
        $region59: #{forward.1} parent=11 // pred_region
          _
        $region60: #{forward.1} parent=11 // pred_fallthru
          _
        // Predicated region
        $region61: #{forward.1} parent=11 // pred_check
          %p556 = pneg %p328
        $region62: #{forward.1} parent=11 // pred_check_branch
          %558 = sbr.rel (%p556) target = $region64
        $region63: #{forward.1} parent=11 // pred_region
          _
        $region64: #{forward.1} parent=11 // pred_fallthru
          _
        // Predicated region
        $region65: #{forward.1} parent=11 // pred_check
          %p559 = pneg %p349
        $region66: #{forward.1} parent=11 // pred_check_branch
          %561 = sbr.rel (%p559) target = $region68
        $region67: #{forward.1} parent=11 // pred_region
          _
        $region68: #{forward.1} parent=11 // pred_fallthru
          _
        // Predicated region
        $region69: #{forward.1} parent=11 // pred_check
          %p562 = pneg %p370
        $region70: #{forward.1} parent=11 // pred_check_branch
          %564 = sbr.rel (%p562) target = $region72
        $region71: #{forward.1} parent=11 // pred_region
          _
        $region72: #{forward.1} parent=11 // pred_fallthru
          _
        // Predicated region
        $region73: #{forward.1} parent=11 // pred_check
          %p565 = pneg %p391
        $region74: #{forward.1} parent=11 // pred_check_branch
          %567 = sbr.rel (%p565) target = $region76
        $region75: #{forward.1} parent=11 // pred_region
          _
        $region76: #{forward.1} parent=11 // pred_fallthru
          _
        // Predicated region
        $region77: #{forward.1} parent=11 // pred_check
          %p568 = pneg %p412
        $region78: #{forward.1} parent=11 // pred_check_branch
          %570 = sbr.rel (%p568) target = $region80
        $region79: #{forward.1} parent=11 // pred_region
          _
        $region80: #{forward.1} parent=11 // pred_fallthru
          _
        // Predicated region
        $region81: #{forward.1} parent=11 // pred_check
          %p571 = pneg %p433
        $region82: #{forward.1} parent=11 // pred_check_branch
          %573 = sbr.rel (%p571) target = $region84
        $region83: #{forward.1} parent=11 // pred_region
          _
        $region84: #{forward.1} parent=11 // pred_fallthru
          _
      $region12: #{forward.1} parent=5 // pred_fallthru
        _
      %p574 = scmp.lt.s32.totalorder %s29, 2
      // Predicated region
      $region85: #{forward.1} parent=5 // pred_check
        %p575 = pneg %p574
      $region86: #{forward.1} parent=5 // pred_check_branch
        %577 = sbr.rel (%p575) target = $region88
      $region87: #{forward.1} parent=5 // pred_region
        // Predicated region
        $region89: #{forward.1} parent=87 // pred_check
          %p578 = pneg %p49
        $region90: #{forward.1} parent=87 // pred_check_branch
          %580 = sbr.rel (%p578) target = $region92
        $region91: #{forward.1} parent=87 // pred_region
          %p581 = scmp.lt.s32.totalorder %s29, 1
          %s582 = scalar_select %p581, %s29, 1
          %s583 = smul.addr %s582, 8
          %s584 = smul.addr %s583, 8
          %s585 = scalar_lea.vmem %s0, %s584
        $region92: #{forward.1} parent=87 // pred_fallthru
          _
      $region88: #{forward.1} parent=5 // pred_fallthru
        _
      %p586 = scmp.le.s32.totalorder 1, %s29
      %p587 = scmp.lt.s32.totalorder %s29, 3
      %p588 = pnand %p586, %p587
      %p589 = pneg %p588
      // Predicated region
      $region93: #{forward.1} parent=5 // pred_check
        _
      $region94: #{forward.1} parent=5 // pred_check_branch
        %591 = sbr.rel (%p588) target = $region96
      $region95: #{forward.1} parent=5 // pred_region
        %s592 = ssub.s32 %s29, 1
        // Predicated region
        $region97: #{forward.1} parent=95 // pred_check
          %p593 = pneg %p76
        $region98: #{forward.1} parent=95 // pred_check_branch
          %595 = sbr.rel (%p593) target = $region100
        $region99: #{forward.1} parent=95 // pred_region
          %596 = dma.done [#allocation5], 448
        $region100: #{forward.1} parent=95 // pred_fallthru
          _
        // Predicated region
        $region101: #{forward.1} parent=95 // pred_check
          %p597 = pneg %p118
        $region102: #{forward.1} parent=95 // pred_check_branch
          %599 = sbr.rel (%p597) target = $region104
        $region103: #{forward.1} parent=95 // pred_region
          %600 = dma.done [#allocation7], 320
        $region104: #{forward.1} parent=95 // pred_fallthru
          _
        %p601 = scmp.lt.s32.totalorder %s34, 1
        %s602 = scalar_select %p601, %s34, 1
        %s603 = smul.addr %s602, 8
        %s604 = smul.addr %s603, 8
        %s605 = scalar_lea.vmem %s0, %s604
        %p606 = pneg %p55
        %p607 = pneg %p52
        %p608 = pneg %p76
        %p609 = pneg %p73
        %p610 = pneg %p97
        %p611 = pneg %p94
        %p612 = pneg %p118
        %p613 = pneg %p115
        %p614 = pneg %p139
        %p615 = pneg %p136
        %p616 = pneg %p160
        %p617 = pneg %p157
        %p618 = pneg %p181
        %p619 = pneg %p178
        %p620 = pneg %p202
        %p621 = pneg %p199
        %p622 = pneg %p223
        %p623 = pneg %p220
        %p624 = pneg %p244
        %p625 = pneg %p241
        %p626 = pneg %p265
        %p627 = pneg %p262
        %p628 = pneg %p286
        %p629 = pneg %p283
        %p630 = pneg %p307
        %p631 = pneg %p304
        %p632 = pneg %p328
        %p633 = pneg %p325
        %p634 = pneg %p349
        %p635 = pneg %p346
        %p636 = pneg %p370
        %p637 = pneg %p367
        %p638 = pneg %p391
        %p639 = pneg %p388
        %p640 = pneg %p412
        %p641 = pneg %p409
        %p642 = pneg %p433
        %p643 = pneg %p430
        %p644 = pneg %p459
        %p645 = pneg %p456
        %p646 = scmp.lt.s32.totalorder %s34, 1
        %s647 = scalar_select %p646, %s34, 1
        %s648 = smul.addr %s647, 2
        %s649 = scalar_lea.vmem %s19, %s648
        %p650 = pneg %p485
        %p651 = pneg %p482
        %p652 = scmp.lt.s32.totalorder %s34, 1
        %s653 = scalar_select %p652, %s34, 1
        %s654 = smul.addr %s653, 2
        %s655 = scalar_lea.vmem %s20, %s654
        %p656 = scmp.lt.s32.totalorder %s34, 1
        %s657 = scalar_select %p656, %s34, 1
        %s658 = smul.addr %s657, 8
        %s659 = smul.addr %s658, 8
        %s660 = scalar_lea.vmem %s0, %s659
        %p661 = scmp.lt.s32.totalorder %s34, 1
        %s662 = scalar_select %p661, %s34, 1
        %s663 = smul.addr %s662, 2
        %s664 = scalar_lea.vmem %s19, %s663
        %p665 = scmp.lt.s32.totalorder %s34, 1
        %s666 = scalar_select %p665, %s34, 1
        %s667 = smul.addr %s666, 2
        %s668 = scalar_lea.vmem %s20, %s667
        %v670 = vld [vmem:[%s660] sm:$0xff]
        %v671 = vld [vmem:[%s660 + $0x8] sm:$0xff]
        %v672 = vld [vmem:[%s660 + $0x10] sm:$0xff]
        %v673 = vld [vmem:[%s660 + $0x18] sm:$0xff]
        %v674 = vld [vmem:[%s660 + $0x20] sm:$0xff]
        %v675 = vld [vmem:[%s660 + $0x28] sm:$0xff]
        %v676 = vld [vmem:[%s660 + $0x30] sm:$0xff]
        %v677 = vld [vmem:[%s660 + $0x38] sm:$0xff]
        %vm678 = vcmask 59392
        %679 = vst.msk [vmem:[#allocation2] sm:$0x7] %vm678, 0.0
        %680 = vst.msk [vmem:[#allocation2 + $0x43] sm:$0x7] %vm678, 0.0
        %vm681 = vcmask 64512
        %682 = vst.msk [vmem:[#allocation2 + $0x3] sm:$0xff] %vm681, %v670
        %683 = vst.msk [vmem:[#allocation2 + $0xb] sm:$0xff] %vm681, %v671
        %684 = vst.msk [vmem:[#allocation2 + $0x13] sm:$0xff] %vm681, %v672
        %685 = vst.msk [vmem:[#allocation2 + $0x1b] sm:$0xff] %vm681, %v673
        %686 = vst.msk [vmem:[#allocation2 + $0x23] sm:$0xff] %vm681, %v674
        %687 = vst.msk [vmem:[#allocation2 + $0x2b] sm:$0xff] %vm681, %v675
        %688 = vst.msk [vmem:[#allocation2 + $0x33] sm:$0xff] %vm681, %v676
        %689 = vst.msk [vmem:[#allocation2 + $0x3b] sm:$0xff] %vm681, %v677
        %v690 = vld [vmem:[#allocation2] ss:$2 sm:$0xff]
        %s691 = scalar_lea.vmem [#allocation2], 16
        %v692 = vld [vmem:[%s691] ss:$2 sm:$0xff]
        %s693 = scalar_lea.vmem [#allocation2], 32
        %v694 = vld [vmem:[%s693] ss:$2 sm:$0xff]
        %s695 = scalar_lea.vmem [#allocation2], 48
        %v696 = vld [vmem:[%s695] ss:$2 sm:$0xff]
        %697 = vst.msk [vmem:[#allocation3] sm:$0xff] %vm681, %v690
        %698 = vst.msk [vmem:[#allocation3 + $0x10] sm:$0xff] %vm681, %v692
        %699 = vst.msk [vmem:[#allocation3 + $0x20] sm:$0xff] %vm681, %v694
        %700 = vst.msk [vmem:[#allocation3 + $0x30] sm:$0xff] %vm681, %v696
        %s701 = scalar_lea.vmem [#allocation2], 1
        %v702 = vld [vmem:[%s701] ss:$2 sm:$0xff]
        %s703 = scalar_lea.vmem [#allocation2], 17
        %v704 = vld [vmem:[%s703] ss:$2 sm:$0xff]
        %s705 = scalar_lea.vmem [#allocation2], 33
        %v706 = vld [vmem:[%s705] ss:$2 sm:$0xff]
        %s707 = scalar_lea.vmem [#allocation2], 49
        %v708 = vld [vmem:[%s707] ss:$2 sm:$0xff]
        %713 = vrot.lane.b32.xlu0 %v702, 8
        %v714 = vpop.permute.xlu0 %713
        %715 = vrot.lane.b32.xlu0 %v704, 8
        %v716 = vpop.permute.xlu0 %715
        %717 = vrot.lane.b32.xlu0 %v706, 8
        %v718 = vpop.permute.xlu0 %717
        %719 = vrot.lane.b32.xlu0 %v708, 8
        %v720 = vpop.permute.xlu0 %719
        %vm725 = vcmask 130112
        %726 = vst.msk [vmem:[#allocation3] sm:$0xff] %vm725, %v714
        %727 = vst.msk [vmem:[#allocation3 + $0x10] sm:$0xff] %vm725, %v716
        %728 = vst.msk [vmem:[#allocation3 + $0x20] sm:$0xff] %vm725, %v718
        %729 = vst.msk [vmem:[#allocation3 + $0x30] sm:$0xff] %vm725, %v720
        %s730 = scalar_lea.vmem [#allocation2], 2
        %v731 = vld [vmem:[%s730] ss:$2 sm:$0xff]
        %s732 = scalar_lea.vmem [#allocation2], 18
        %v733 = vld [vmem:[%s732] ss:$2 sm:$0xff]
        %s734 = scalar_lea.vmem [#allocation2], 34
        %v735 = vld [vmem:[%s734] ss:$2 sm:$0xff]
        %s736 = scalar_lea.vmem [#allocation2], 50
        %v737 = vld [vmem:[%s736] ss:$2 sm:$0xff]
        %742 = vrot.lane.b32.xlu0 %v731, 16
        %v743 = vpop.permute.xlu0 %742
        %744 = vrot.lane.b32.xlu0 %v733, 16
        %v745 = vpop.permute.xlu0 %744
        %746 = vrot.lane.b32.xlu0 %v735, 16
        %v747 = vpop.permute.xlu0 %746
        %748 = vrot.lane.b32.xlu0 %v737, 16
        %v749 = vpop.permute.xlu0 %748
        %vm754 = vcmask 195712
        %755 = vst.msk [vmem:[#allocation3] sm:$0xff] %vm754, %v743
        %756 = vst.msk [vmem:[#allocation3 + $0x10] sm:$0xff] %vm754, %v745
        %757 = vst.msk [vmem:[#allocation3 + $0x20] sm:$0xff] %vm754, %v747
        %758 = vst.msk [vmem:[#allocation3 + $0x30] sm:$0xff] %vm754, %v749
        %s759 = scalar_lea.vmem [#allocation2], 3
        %v760 = vld [vmem:[%s759] ss:$2 sm:$0xff]
        %s761 = scalar_lea.vmem [#allocation2], 19
        %v762 = vld [vmem:[%s761] ss:$2 sm:$0xff]
        %s763 = scalar_lea.vmem [#allocation2], 35
        %v764 = vld [vmem:[%s763] ss:$2 sm:$0xff]
        %s765 = scalar_lea.vmem [#allocation2], 51
        %v766 = vld [vmem:[%s765] ss:$2 sm:$0xff]
        %771 = vrot.lane.b32.xlu0 %v760, 24
        %v772 = vpop.permute.xlu0 %771
        %773 = vrot.lane.b32.xlu0 %v762, 24
        %v774 = vpop.permute.xlu0 %773
        %775 = vrot.lane.b32.xlu0 %v764, 24
        %v776 = vpop.permute.xlu0 %775
        %777 = vrot.lane.b32.xlu0 %v766, 24
        %v778 = vpop.permute.xlu0 %777
        %vm783 = vcmask 261312
        %784 = vst.msk [vmem:[#allocation3] sm:$0xff] %vm783, %v772
        %785 = vst.msk [vmem:[#allocation3 + $0x10] sm:$0xff] %vm783, %v774
        %786 = vst.msk [vmem:[#allocation3 + $0x20] sm:$0xff] %vm783, %v776
        %787 = vst.msk [vmem:[#allocation3 + $0x30] sm:$0xff] %vm783, %v778
        %s788 = scalar_lea.vmem [#allocation2], 4
        %v789 = vld [vmem:[%s788] ss:$2 sm:$0xff]
        %s790 = scalar_lea.vmem [#allocation2], 20
        %v791 = vld [vmem:[%s790] ss:$2 sm:$0xff]
        %s792 = scalar_lea.vmem [#allocation2], 36
        %v793 = vld [vmem:[%s792] ss:$2 sm:$0xff]
        %s794 = scalar_lea.vmem [#allocation2], 52
        %v795 = vld [vmem:[%s794] ss:$2 sm:$0xff]
        %800 = vrot.lane.b32.xlu0 %v789, 32
        %v801 = vpop.permute.xlu0 %800
        %802 = vrot.lane.b32.xlu0 %v791, 32
        %v803 = vpop.permute.xlu0 %802
        %804 = vrot.lane.b32.xlu0 %v793, 32
        %v805 = vpop.permute.xlu0 %804
        %806 = vrot.lane.b32.xlu0 %v795, 32
        %v807 = vpop.permute.xlu0 %806
        %vm812 = vcmask 326912
        %813 = vst.msk [vmem:[#allocation3] sm:$0xff] %vm812, %v801
        %814 = vst.msk [vmem:[#allocation3 + $0x10] sm:$0xff] %vm812, %v803
        %815 = vst.msk [vmem:[#allocation3 + $0x20] sm:$0xff] %vm812, %v805
        %816 = vst.msk [vmem:[#allocation3 + $0x30] sm:$0xff] %vm812, %v807
        %s817 = scalar_lea.vmem [#allocation2], 5
        %v818 = vld [vmem:[%s817] ss:$2 sm:$0xff]
        %s819 = scalar_lea.vmem [#allocation2], 21
        %v820 = vld [vmem:[%s819] ss:$2 sm:$0xff]
        %s821 = scalar_lea.vmem [#allocation2], 37
        %v822 = vld [vmem:[%s821] ss:$2 sm:$0xff]
        %s823 = scalar_lea.vmem [#allocation2], 53
        %v824 = vld [vmem:[%s823] ss:$2 sm:$0xff]
        %829 = vrot.lane.b32.xlu0 %v818, 40
        %v830 = vpop.permute.xlu0 %829
        %831 = vrot.lane.b32.xlu0 %v820, 40
        %v832 = vpop.permute.xlu0 %831
        %833 = vrot.lane.b32.xlu0 %v822, 40
        %v834 = vpop.permute.xlu0 %833
        %835 = vrot.lane.b32.xlu0 %v824, 40
        %v836 = vpop.permute.xlu0 %835
        %vm841 = vcmask 392512
        %842 = vst.msk [vmem:[#allocation3] sm:$0xff] %vm841, %v830
        %843 = vst.msk [vmem:[#allocation3 + $0x10] sm:$0xff] %vm841, %v832
        %844 = vst.msk [vmem:[#allocation3 + $0x20] sm:$0xff] %vm841, %v834
        %845 = vst.msk [vmem:[#allocation3 + $0x30] sm:$0xff] %vm841, %v836
        %s846 = scalar_lea.vmem [#allocation2], 6
        %v847 = vld [vmem:[%s846] ss:$2 sm:$0xff]
        %s848 = scalar_lea.vmem [#allocation2], 22
        %v849 = vld [vmem:[%s848] ss:$2 sm:$0xff]
        %s850 = scalar_lea.vmem [#allocation2], 38
        %v851 = vld [vmem:[%s850] ss:$2 sm:$0xff]
        %s852 = scalar_lea.vmem [#allocation2], 54
        %v853 = vld [vmem:[%s852] ss:$2 sm:$0xff]
        %858 = vrot.lane.b32.xlu0 %v847, 48
        %v859 = vpop.permute.xlu0 %858
        %860 = vrot.lane.b32.xlu0 %v849, 48
        %v861 = vpop.permute.xlu0 %860
        %862 = vrot.lane.b32.xlu0 %v851, 48
        %v863 = vpop.permute.xlu0 %862
        %864 = vrot.lane.b32.xlu0 %v853, 48
        %v865 = vpop.permute.xlu0 %864
        %vm870 = vcmask 458112
        %871 = vst.msk [vmem:[#allocation3] sm:$0xff] %vm870, %v859
        %872 = vst.msk [vmem:[#allocation3 + $0x10] sm:$0xff] %vm870, %v861
        %873 = vst.msk [vmem:[#allocation3 + $0x20] sm:$0xff] %vm870, %v863
        %874 = vst.msk [vmem:[#allocation3 + $0x30] sm:$0xff] %vm870, %v865
        %v875 = vld [vmem:[#allocation3] sm:$0xff]
        %v876 = vld [vmem:[#allocation3 + $0x10] sm:$0xff]
        %v877 = vld [vmem:[#allocation3 + $0x20] sm:$0xff]
        %v878 = vld [vmem:[#allocation3 + $0x30] sm:$0xff]
        %v879 = vpack.c.bf16 %v876, %v875
        %v880 = vpack.c.bf16 %v878, %v877
        %v881 = vld [vmem:[#allocation4] sm:$0xf]
        %v882 = vld [vmem:[#allocation4 + $0x4] sm:$0xf]
        %v883 = vld [vmem:[#allocation4 + $0x8] sm:$0xf]
        %v884 = vld [vmem:[#allocation4 + $0xc] sm:$0xf]
        %v885 = vld [vmem:[#allocation4 + $0x10] sm:$0xf]
        %v886 = vld [vmem:[#allocation4 + $0x14] sm:$0xf]
        %v887 = vld [vmem:[#allocation4 + $0x18] sm:$0xf]
        %v888 = vld [vmem:[%s2] sm:$0x1]
        %v890 = vlaneseq
        %v891 = vshrl.u32 %v890, 7
        %v892 = vsub.s32 0, %v891
        %v893 = vrot.slane %v888, %v892
        %v902 = vunpack.c.l.b16 %v881
        %v903 = vunpack.c.l.b16 %v882
        %v904 = vunpack.c.l.b16 %v883
        %v905 = vunpack.c.l.b16 %v884
        %v906 = vunpack.c.l.b16 %v885
        %v907 = vunpack.c.l.b16 %v886
        %v908 = vunpack.c.l.b16 %v887
        %v909 = vpack.c.b16 %v903, %v902
        %v910 = vpack.c.b16 %v905, %v904
        %v911 = vpack.c.b16 %v907, %v906
        %v912 = vpack.c.b16 %v908, %v908
        %vm916 = vcmask 457728
        %v918 = vsel %vm916, %v879, 0
        %v921 = vsel %vm916, %v880, 0
        %vm923 = vcmask 1043456
        %v925 = vsel %vm923, %v912, 0
        %927 = vmatprep.subr.bf16.mxu0 0
        %928 = vmatpush1.bf16.msra.mxu0 %v909
        %929 = vmatprep.subr.bf16.mxu0 0
        %930 = vmatpush1.bf16.msra.mxu0 %v910
        %931 = vmatprep.subr.bf16.mxu0 0
        %932 = vmatpush1.bf16.msra.mxu0 %v911
        %933 = vmatprep.subr.bf16.mxu0 0
        %934 = vmatpush1.bf16.msra.mxu0 %v925
        %935 = vmatprep.subr.bf16.mxu0 0
        %936 = vmatpush1.bf16.msra.mxu0 0
        %937 = vmatprep.subr.bf16.mxu0 0
        %938 = vmatpush1.bf16.msra.mxu0 0
        %939 = vmatprep.subr.bf16.mxu0 0
        %940 = vmatpush1.bf16.msra.mxu0 0
        %941 = vmatprep.subr.bf16.mxu0 0
        %942 = vmatpush1.bf16.msra.mxu0 0
        %943 = vmatprep.subr.bf16.mxu0 0
        %944 = vmatpush1.bf16.msra.mxu0 0
        %945 = vmatprep.subr.bf16.mxu0 0
        %946 = vmatpush1.bf16.msra.mxu0 0
        %947 = vmatprep.subr.bf16.mxu0 0
        %948 = vmatpush1.bf16.msra.mxu0 0
        %949 = vmatprep.subr.bf16.mxu0 0
        %950 = vmatpush1.bf16.msra.mxu0 0
        %951 = vmatprep.subr.bf16.mxu0 0
        %952 = vmatpush1.bf16.msra.mxu0 0
        %953 = vmatprep.subr.bf16.mxu0 0
        %954 = vmatpush1.bf16.msra.mxu0 0
        %955 = vmatprep.subr.bf16.mxu0 0
        %956 = vmatpush1.bf16.msra.mxu0 0
        %957 = vmatprep.subr.bf16.mxu0 0
        %958 = vmatpush1.bf16.msra.mxu0 0
        %959 = vmatprep.mubr.bf16.mxu0 0
        %960 = vmatmul.mubr.bf16.gmra.mrb[0].mxu0 %v918
        %v961 = vpop.f32.mrb[0].mxu0
        %v962 = vadd.f32 %v893, %v961
        %v963 = vpop.f32.mrb[0].mxu0
        %v964 = vpop.f32.mrb[0].mxu0
        %v965 = vadd.f32 %v893, %v964
        %v966 = vpop.f32.mrb[0].mxu0
        %967 = vmatprep.mubr.bf16.mxu0 0
        %968 = vmatmul.mubr.bf16.gmra.mrb[0].mxu0 %v921
        %v969 = vpop.f32.mrb[0].mxu0
        %v970 = vadd.f32 %v893, %v969
        %v971 = vpop.f32.mrb[0].mxu0
        %v972 = vpop.f32.mrb[0].mxu0
        %v973 = vadd.f32 %v893, %v972
        %v974 = vpop.f32.mrb[0].mxu0
        %975 = vdwg.mxu0
        %vm976 = vcmp.gt.f32.partialorder %v962, 0.0
        %vm977 = vcmp.gt.f32.partialorder %v965, 0.0
        %vm978 = vcmp.gt.f32.partialorder %v970, 0.0
        %vm979 = vcmp.gt.f32.partialorder %v973, 0.0
        %v980 = vmul.f32 %v962, 0.1
        %v981 = vmul.f32 %v965, 0.1
        %v982 = vmul.f32 %v970, 0.1
        %v983 = vmul.f32 %v973, 0.1
        %v984 = vsel %vm976, %v962, %v980
        %v985 = vsel %vm977, %v965, %v981
        %v986 = vsel %vm978, %v970, %v982
        %v987 = vsel %vm979, %v973, %v983
        %vm988 = vcmask 58368
        %989 = vst.msk [vmem:[#allocation2] sm:$0x3] %vm988, 0.0
        %990 = vst.msk [vmem:[#allocation2 + $0x22] sm:$0x3] %vm988, 0.0
        %991 = vst.msk [vmem:[#allocation2 + $0x2] sm:$0xff] %vm681, %v984
        %992 = vst.msk [vmem:[#allocation2 + $0xa] sm:$0xff] %vm681, %v985
        %993 = vst.msk [vmem:[#allocation2 + $0x12] sm:$0xff] %vm681, %v986
        %994 = vst.msk [vmem:[#allocation2 + $0x1a] sm:$0xff] %vm681, %v987
        %v995 = vld [vmem:[#allocation2] ss:$2 sm:$0xff]
        %v996 = vld [vmem:[%s691] ss:$2 sm:$0xff]
        %997 = vst.msk [vmem:[#allocation3] sm:$0xff] %vm681, %v995
        %998 = vst.msk [vmem:[#allocation3 + $0x10] sm:$0xff] %vm681, %v996
        %v999 = vld [vmem:[%s701] ss:$2 sm:$0xff]
        %v1000 = vld [vmem:[%s703] ss:$2 sm:$0xff]
        %1003 = vrot.lane.b32.xlu0 %v999, 8
        %v1004 = vpop.permute.xlu0 %1003
        %1005 = vrot.lane.b32.xlu0 %v1000, 8
        %v1006 = vpop.permute.xlu0 %1005
        %1009 = vst.msk [vmem:[#allocation3] sm:$0xff] %vm725, %v1004
        %1010 = vst.msk [vmem:[#allocation3 + $0x10] sm:$0xff] %vm725, %v1006
        %v1011 = vld [vmem:[%s730] ss:$2 sm:$0xff]
        %v1012 = vld [vmem:[%s732] ss:$2 sm:$0xff]
        %1015 = vrot.lane.b32.xlu0 %v1011, 16
        %v1016 = vpop.permute.xlu0 %1015
        %1017 = vrot.lane.b32.xlu0 %v1012, 16
        %v1018 = vpop.permute.xlu0 %1017
        %1021 = vst.msk [vmem:[#allocation3] sm:$0xff] %vm754, %v1016
        %1022 = vst.msk [vmem:[#allocation3 + $0x10] sm:$0xff] %vm754, %v1018
        %v1023 = vld [vmem:[%s759] ss:$2 sm:$0xff]
        %v1024 = vld [vmem:[%s761] ss:$2 sm:$0xff]
        %1027 = vrot.lane.b32.xlu0 %v1023, 24
        %v1028 = vpop.permute.xlu0 %1027
        %1029 = vrot.lane.b32.xlu0 %v1024, 24
        %v1030 = vpop.permute.xlu0 %1029
        %1033 = vst.msk [vmem:[#allocation3] sm:$0xff] %vm783, %v1028
        %1034 = vst.msk [vmem:[#allocation3 + $0x10] sm:$0xff] %vm783, %v1030
        %v1035 = vld [vmem:[%s788] ss:$2 sm:$0xff]
        %v1036 = vld [vmem:[%s790] ss:$2 sm:$0xff]
        %1039 = vrot.lane.b32.xlu0 %v1035, 32
        %v1040 = vpop.permute.xlu0 %1039
        %1041 = vrot.lane.b32.xlu0 %v1036, 32
        %v1042 = vpop.permute.xlu0 %1041
        %1045 = vst.msk [vmem:[#allocation3] sm:$0xff] %vm812, %v1040
        %1046 = vst.msk [vmem:[#allocation3 + $0x10] sm:$0xff] %vm812, %v1042
        %v1047 = vld [vmem:[#allocation3] sm:$0xff]
        %v1048 = vld [vmem:[#allocation3 + $0x10] sm:$0xff]
        %v1049 = vpack.c.bf16 %v1048, %v1047
        %v1050 = vld [vmem:[#allocation6] sm:$0xf]
        %v1051 = vld [vmem:[#allocation6 + $0x4] sm:$0xf]
        %v1052 = vld [vmem:[#allocation6 + $0x8] sm:$0xf]
        %v1053 = vld [vmem:[#allocation6 + $0xc] sm:$0xf]
        %v1054 = vld [vmem:[#allocation6 + $0x10] sm:$0xf]
        %v1055 = vld [vmem:[%s4] sm:$0x1]
        %v1057 = vlaneseq
        %v1058 = vshrl.u32 %v1057, 7
        %v1059 = vsub.s32 0, %v1058
        %v1060 = vrot.slane %v1055, %v1059
        %v1067 = vunpack.c.l.b16 %v1050
        %v1068 = vunpack.c.l.b16 %v1051
        %v1069 = vunpack.c.l.b16 %v1052
        %v1070 = vunpack.c.l.b16 %v1053
        %v1071 = vunpack.c.l.b16 %v1054
        %v1072 = vpack.c.b16 %v1068, %v1067
        %v1073 = vpack.c.b16 %v1070, %v1069
        %v1074 = vpack.c.b16 %v1071, %v1071
        %vm1077 = vcmask 326656
        %v1079 = vsel %vm1077, %v1049, 0
        %v1082 = vsel %vm923, %v1074, 0
        %1084 = vmatprep.subr.bf16.mxu0 0
        %1085 = vmatpush1.bf16.msra.mxu0 %v1072
        %1086 = vmatprep.subr.bf16.mxu0 0
        %1087 = vmatpush1.bf16.msra.mxu0 %v1073
        %1088 = vmatprep.subr.bf16.mxu0 0
        %1089 = vmatpush1.bf16.msra.mxu0 %v1082
        %1090 = vmatprep.subr.bf16.mxu0 0
        %1091 = vmatpush1.bf16.msra.mxu0 0
        %1092 = vmatprep.subr.bf16.mxu0 0
        %1093 = vmatpush1.bf16.msra.mxu0 0
        %1094 = vmatprep.subr.bf16.mxu0 0
        %1095 = vmatpush1.bf16.msra.mxu0 0
        %1096 = vmatprep.subr.bf16.mxu0 0
        %1097 = vmatpush1.bf16.msra.mxu0 0
        %1098 = vmatprep.subr.bf16.mxu0 0
        %1099 = vmatpush1.bf16.msra.mxu0 0
        %1100 = vmatprep.subr.bf16.mxu0 0
        %1101 = vmatpush1.bf16.msra.mxu0 0
        %1102 = vmatprep.subr.bf16.mxu0 0
        %1103 = vmatpush1.bf16.msra.mxu0 0
        %1104 = vmatprep.subr.bf16.mxu0 0
        %1105 = vmatpush1.bf16.msra.mxu0 0
        %1106 = vmatprep.subr.bf16.mxu0 0
        %1107 = vmatpush1.bf16.msra.mxu0 0
        %1108 = vmatprep.subr.bf16.mxu0 0
        %1109 = vmatpush1.bf16.msra.mxu0 0
        %1110 = vmatprep.subr.bf16.mxu0 0
        %1111 = vmatpush1.bf16.msra.mxu0 0
        %1112 = vmatprep.subr.bf16.mxu0 0
        %1113 = vmatpush1.bf16.msra.mxu0 0
        %1114 = vmatprep.subr.bf16.mxu0 0
        %1115 = vmatpush1.bf16.msra.mxu0 0
        %1116 = vmatprep.mubr.bf16.mxu0 0
        %1117 = vmatmul.mubr.bf16.gmra.mrb[0].mxu0 %v1079
        %v1118 = vpop.f32.mrb[0].mxu0
        %v1119 = vadd.f32 %v1060, %v1118
        %v1120 = vpop.f32.mrb[0].mxu0
        %v1121 = vpop.f32.mrb[0].mxu0
        %v1122 = vadd.f32 %v1060, %v1121
        %v1123 = vpop.f32.mrb[0].mxu0
        %1124 = vdwg.mxu0
        %vm1125 = vcmp.gt.f32.partialorder %v1119, 0.0
        %vm1126 = vcmp.gt.f32.partialorder %v1122, 0.0
        %v1127 = vmul.f32 %v1119, 0.1
        %v1128 = vmul.f32 %v1122, 0.1
        %v1129 = vsel %vm1125, %v1119, %v1127
        %v1130 = vsel %vm1126, %v1122, %v1128
        %vm1131 = vcmask 122880
        %1132 = vst.msk [vmem:[#allocation2] sm:$0x1] %vm1131, 0.0
        %1133 = vst.msk [vmem:[#allocation2 + $0x11] sm:$0x1] %vm1131, 0.0
        %vm1134 = vcmask 130048
        %1135 = vst.msk [vmem:[#allocation2 + $0x1] sm:$0xff] %vm1134, %v1129
        %1136 = vst.msk [vmem:[#allocation2 + $0x9] sm:$0xff] %vm1134, %v1130
        %v1137 = vld [vmem:[#allocation2] sm:$0xff]
        %v1138 = vld [vmem:[#allocation2 + $0x8] sm:$0xff]
        %1139 = vst.msk [vmem:[#allocation3] sm:$0xff] %vm1134, %v1137
        %1140 = vst.msk [vmem:[#allocation3 + $0x10] sm:$0xff] %vm1134, %v1138
        %v1141 = vld [vmem:[#allocation2 + $0x1] sm:$0xff]
        %v1142 = vld [vmem:[#allocation2 + $0x9] sm:$0xff]
        %1145 = vrot.lane.b32.xlu0 %v1141, 16
        %v1146 = vpop.permute.xlu0 %1145
        %1147 = vrot.lane.b32.xlu0 %v1142, 16
        %v1148 = vpop.permute.xlu0 %1147
        %vm1151 = vcmask 261248
        %1152 = vst.msk [vmem:[#allocation3] sm:$0xff] %vm1151, %v1146
        %1153 = vst.msk [vmem:[#allocation3 + $0x10] sm:$0xff] %vm1151, %v1148
        %v1154 = vld [vmem:[#allocation2 + $0x2] sm:$0xff]
        %v1155 = vld [vmem:[#allocation2 + $0xa] sm:$0xff]
        %1158 = vrot.lane.b32.xlu0 %v1154, 32
        %v1159 = vpop.permute.xlu0 %1158
        %1160 = vrot.lane.b32.xlu0 %v1155, 32
        %v1161 = vpop.permute.xlu0 %1160
        %vm1164 = vcmask 392448
        %1165 = vst.msk [vmem:[#allocation3] sm:$0xff] %vm1164, %v1159
        %1166 = vst.msk [vmem:[#allocation3 + $0x10] sm:$0xff] %vm1164, %v1161
        %v1167 = vld [vmem:[#allocation3] sm:$0xff]
        %v1168 = vld [vmem:[#allocation3 + $0x10] sm:$0xff]
        %v1169 = vpack.c.bf16 %v1168, %v1167
        %v1170 = vld [vmem:[%s5] sm:$0xf]
        %v1171 = vld [vmem:[%s5 + $0x4] sm:$0xf]
        %v1172 = vld [vmem:[%s5 + $0x8] sm:$0xf]
        %v1173 = vld [vmem:[%s5 + $0xc] sm:$0xf]
        %v1174 = vld [vmem:[%s5 + $0x10] sm:$0xf]
        %v1175 = vld [vmem:[%s5 + $0x14] sm:$0xf]
        %v1176 = vld [vmem:[%s6] sm:$0x1]
        %v1178 = vlaneseq
        %v1179 = vshrl.u32 %v1178, 7
        %v1180 = vsub.s32 0, %v1179
        %v1181 = vrot.slane %v1176, %v1180
        %v1189 = vunpack.c.l.b16 %v1170
        %v1190 = vunpack.c.l.b16 %v1171
        %v1191 = vunpack.c.l.b16 %v1172
        %v1192 = vunpack.c.l.b16 %v1173
        %v1193 = vunpack.c.l.b16 %v1174
        %v1194 = vunpack.c.l.b16 %v1175
        %v1195 = vpack.c.b16 %v1190, %v1189
        %v1196 = vpack.c.b16 %v1192, %v1191
        %v1197 = vpack.c.b16 %v1194, %v1193
        %vm1201 = vcmask 392192
        %v1203 = vsel %vm1201, %v1169, 0
        %1205 = vmatprep.subr.bf16.mxu0 0
        %1206 = vmatpush1.bf16.msra.mxu0 %v1195
        %1207 = vmatprep.subr.bf16.mxu0 0
        %1208 = vmatpush1.bf16.msra.mxu0 %v1196
        %1209 = vmatprep.subr.bf16.mxu0 0
        %1210 = vmatpush1.bf16.msra.mxu0 %v1197
        %1211 = vmatprep.subr.bf16.mxu0 0
        %1212 = vmatpush1.bf16.msra.mxu0 0
        %1213 = vmatprep.subr.bf16.mxu0 0
        %1214 = vmatpush1.bf16.msra.mxu0 0
        %1215 = vmatprep.subr.bf16.mxu0 0
        %1216 = vmatpush1.bf16.msra.mxu0 0
        %1217 = vmatprep.subr.bf16.mxu0 0
        %1218 = vmatpush1.bf16.msra.mxu0 0
        %1219 = vmatprep.subr.bf16.mxu0 0
        %1220 = vmatpush1.bf16.msra.mxu0 0
        %1221 = vmatprep.subr.bf16.mxu0 0
        %1222 = vmatpush1.bf16.msra.mxu0 0
        %1223 = vmatprep.subr.bf16.mxu0 0
        %1224 = vmatpush1.bf16.msra.mxu0 0
        %1225 = vmatprep.subr.bf16.mxu0 0
        %1226 = vmatpush1.bf16.msra.mxu0 0
        %1227 = vmatprep.subr.bf16.mxu0 0
        %1228 = vmatpush1.bf16.msra.mxu0 0
        %1229 = vmatprep.subr.bf16.mxu0 0
        %1230 = vmatpush1.bf16.msra.mxu0 0
        %1231 = vmatprep.subr.bf16.mxu0 0
        %1232 = vmatpush1.bf16.msra.mxu0 0
        %1233 = vmatprep.subr.bf16.mxu0 0
        %1234 = vmatpush1.bf16.msra.mxu0 0
        %1235 = vmatprep.subr.bf16.mxu0 0
        %1236 = vmatpush1.bf16.msra.mxu0 0
        %1237 = vmatprep.mubr.bf16.mxu0 0
        %1238 = vmatmul.mubr.bf16.gmra.mrb[0].mxu0 %v1203
        %v1239 = vpop.f32.mrb[0].mxu0
        %v1240 = vadd.f32 %v1181, %v1239
        %v1241 = vpop.f32.mrb[0].mxu0
        %v1242 = vpop.f32.mrb[0].mxu0
        %v1243 = vadd.f32 %v1181, %v1242
        %v1244 = vpop.f32.mrb[0].mxu0
        %1245 = vdwg.mxu0
        %vm1246 = vcmp.gt.f32.partialorder %v1240, 0.0
        %vm1247 = vcmp.gt.f32.partialorder %v1243, 0.0
        %v1248 = vmul.f32 %v1240, 0.1
        %v1249 = vmul.f32 %v1243, 0.1
        %v1250 = vsel %vm1246, %v1240, %v1248
        %v1251 = vsel %vm1247, %v1243, %v1249
        %vm1252 = vcmask 253952
        %1253 = vst.msk [vmem:[#allocation2] sm:$0x1] %vm1252, 0.0
        %1254 = vst.msk [vmem:[#allocation2 + $0x11] sm:$0x1] %vm1252, 0.0
        %vm1255 = vcmask 261120
        %1256 = vst.msk [vmem:[#allocation2 + $0x1] sm:$0xff] %vm1255, %v1250
        %1257 = vst.msk [vmem:[#allocation2 + $0x9] sm:$0xff] %vm1255, %v1251
        %v1258 = vld [vmem:[#allocation2] sm:$0xff]
        %v1259 = vld [vmem:[#allocation2 + $0x8] sm:$0xff]
        %1260 = vst.msk [vmem:[#allocation3] sm:$0xff] %vm1255, %v1258
        %1261 = vst.msk [vmem:[#allocation3 + $0x10] sm:$0xff] %vm1255, %v1259
        %v1262 = vld [vmem:[#allocation2 + $0x1] sm:$0xff]
        %v1263 = vld [vmem:[#allocation2 + $0x9] sm:$0xff]
        %1266 = vrot.lane.b32.xlu0 %v1262, 32
        %v1267 = vpop.permute.xlu0 %1266
        %1268 = vrot.lane.b32.xlu0 %v1263, 32
        %v1269 = vpop.permute.xlu0 %1268
        %vm1272 = vcmask 523520
        %1273 = vst.msk [vmem:[#allocation3] sm:$0xff] %vm1272, %v1267
        %1274 = vst.msk [vmem:[#allocation3 + $0x10] sm:$0xff] %vm1272, %v1269
        %v1275 = vld [vmem:[#allocation2 + $0x2] sm:$0xff]
        %v1276 = vld [vmem:[#allocation2 + $0xa] sm:$0xff]
        %1279 = vrot.lane.b32.xlu0 %v1275, 64
        %v1280 = vpop.permute.xlu0 %1279
        %1281 = vrot.lane.b32.xlu0 %v1276, 64
        %v1282 = vpop.permute.xlu0 %1281
        %vm1285 = vcmask 785920
        %1286 = vst.msk [vmem:[#allocation3] sm:$0xff] %vm1285, %v1280
        %1287 = vst.msk [vmem:[#allocation3 + $0x10] sm:$0xff] %vm1285, %v1282
        %v1288 = vld [vmem:[#allocation3] sm:$0xff]
        %v1289 = vld [vmem:[#allocation3 + $0x10] sm:$0xff]
        %v1290 = vpack.c.bf16 %v1289, %v1288
        %v1291 = vld [vmem:[%s7] sm:$0xf]
        %v1292 = vld [vmem:[%s7 + $0x4] sm:$0xf]
        %v1293 = vld [vmem:[%s7 + $0x8] sm:$0xf]
        %v1294 = vld [vmem:[%s7 + $0xc] sm:$0xf]
        %v1295 = vld [vmem:[%s7 + $0x10] sm:$0xf]
        %v1296 = vld [vmem:[%s7 + $0x14] sm:$0xf]
        %v1297 = vld [vmem:[%s7 + $0x18] sm:$0xf]
        %v1298 = vld [vmem:[%s7 + $0x1c] sm:$0xf]
        %v1299 = vld [vmem:[%s7 + $0x20] sm:$0xf]
        %v1300 = vld [vmem:[%s7 + $0x24] sm:$0xf]
        %v1301 = vld [vmem:[%s7 + $0x28] sm:$0xf]
        %v1302 = vld [vmem:[%s7 + $0x2c] sm:$0xf]
        %v1303 = vld [vmem:[%s8] sm:$0x1]
        %v1305 = vlaneseq
        %v1306 = vshrl.u32 %v1305, 7
        %v1307 = vsub.s32 0, %v1306
        %v1308 = vrot.slane %v1303, %v1307
        %v1322 = vunpack.c.l.b16 %v1291
        %v1323 = vunpack.c.l.b16 %v1292
        %v1324 = vunpack.c.l.b16 %v1293
        %v1325 = vunpack.c.l.b16 %v1294
        %v1326 = vunpack.c.l.b16 %v1295
        %v1327 = vunpack.c.l.b16 %v1296
        %v1328 = vunpack.c.l.b16 %v1297
        %v1329 = vunpack.c.l.b16 %v1298
        %v1330 = vunpack.c.l.b16 %v1299
        %v1331 = vunpack.c.l.b16 %v1300
        %v1332 = vunpack.c.l.b16 %v1301
        %v1333 = vunpack.c.l.b16 %v1302
        %v1334 = vpack.c.b16 %v1323, %v1322
        %v1335 = vpack.c.b16 %v1325, %v1324
        %v1336 = vpack.c.b16 %v1327, %v1326
        %v1337 = vpack.c.b16 %v1329, %v1328
        %v1338 = vpack.c.b16 %v1331, %v1330
        %v1339 = vpack.c.b16 %v1333, %v1332
        %vm1346 = vcmask 785408
        %v1348 = vsel %vm1346, %v1290, 0
        %1350 = vmatprep.subr.bf16.mxu0 0
        %1351 = vmatpush1.bf16.msra.mxu0 %v1334
        %1352 = vmatprep.subr.bf16.mxu0 0
        %1353 = vmatpush1.bf16.msra.mxu0 %v1335
        %1354 = vmatprep.subr.bf16.mxu0 0
        %1355 = vmatpush1.bf16.msra.mxu0 %v1336
        %1356 = vmatprep.subr.bf16.mxu0 0
        %1357 = vmatpush1.bf16.msra.mxu0 %v1337
        %1358 = vmatprep.subr.bf16.mxu0 0
        %1359 = vmatpush1.bf16.msra.mxu0 %v1338
        %1360 = vmatprep.subr.bf16.mxu0 0
        %1361 = vmatpush1.bf16.msra.mxu0 %v1339
        %1362 = vmatprep.subr.bf16.mxu0 0
        %1363 = vmatpush1.bf16.msra.mxu0 0
        %1364 = vmatprep.subr.bf16.mxu0 0
        %1365 = vmatpush1.bf16.msra.mxu0 0
        %1366 = vmatprep.subr.bf16.mxu0 0
        %1367 = vmatpush1.bf16.msra.mxu0 0
        %1368 = vmatprep.subr.bf16.mxu0 0
        %1369 = vmatpush1.bf16.msra.mxu0 0
        %1370 = vmatprep.subr.bf16.mxu0 0
        %1371 = vmatpush1.bf16.msra.mxu0 0
        %1372 = vmatprep.subr.bf16.mxu0 0
        %1373 = vmatpush1.bf16.msra.mxu0 0
        %1374 = vmatprep.subr.bf16.mxu0 0
        %1375 = vmatpush1.bf16.msra.mxu0 0
        %1376 = vmatprep.subr.bf16.mxu0 0
        %1377 = vmatpush1.bf16.msra.mxu0 0
        %1378 = vmatprep.subr.bf16.mxu0 0
        %1379 = vmatpush1.bf16.msra.mxu0 0
        %1380 = vmatprep.subr.bf16.mxu0 0
        %1381 = vmatpush1.bf16.msra.mxu0 0
        %1382 = vmatprep.mubr.bf16.mxu0 0
        %1383 = vmatmul.mubr.bf16.gmra.mrb[0].mxu0 %v1348
        %v1384 = vpop.f32.mrb[0].mxu0
        %v1385 = vadd.f32 %v1308, %v1384
        %v1386 = vpop.f32.mrb[0].mxu0
        %v1387 = vpop.f32.mrb[0].mxu0
        %v1388 = vadd.f32 %v1308, %v1387
        %v1389 = vpop.f32.mrb[0].mxu0
        %1390 = vdwg.mxu0
        %vm1391 = vcmp.gt.f32.partialorder %v1385, 0.0
        %vm1392 = vcmp.gt.f32.partialorder %v1388, 0.0
        %v1393 = vmul.f32 %v1385, 0.1
        %v1394 = vmul.f32 %v1388, 0.1
        %v1395 = vsel %vm1391, %v1385, %v1393
        %v1396 = vsel %vm1392, %v1388, %v1394
        %vm1397 = vcmask 516096
        %1398 = vst.msk [vmem:[#allocation2] sm:$0x1] %vm1397, 0.0
        %1399 = vst.msk [vmem:[#allocation2 + $0x11] sm:$0x1] %vm1397, 0.0
        %vm1400 = vcmask 523264
        %1401 = vst.msk [vmem:[#allocation2 + $0x1] sm:$0xff] %vm1400, %v1395
        %1402 = vst.msk [vmem:[#allocation2 + $0x9] sm:$0xff] %vm1400, %v1396
        %v1403 = vld [vmem:[#allocation2] sm:$0xff]
        %v1404 = vld [vmem:[#allocation2 + $0x8] sm:$0xff]
        %1405 = vst.msk [vmem:[#allocation3] sm:$0xff] %vm1400, %v1403
        %1406 = vst.msk [vmem:[#allocation3 + $0x10] sm:$0xff] %vm1400, %v1404
        %v1407 = vld [vmem:[#allocation2 + $0x1] sm:$0xff]
        %v1408 = vld [vmem:[#allocation2 + $0x9] sm:$0xff]
        %1411 = vrot.lane.b32.xlu0 %v1407, 64
        %v1412 = vpop.permute.xlu0 %1411
        %1413 = vrot.lane.b32.xlu0 %v1408, 64
        %v1414 = vpop.permute.xlu0 %1413
        %vm1417 = vcmask 1048064
        %1418 = vst.msk [vmem:[#allocation3] sm:$0xff] %vm1417, %v1412
        %1419 = vst.msk [vmem:[#allocation3 + $0x10] sm:$0xff] %vm1417, %v1414
        %v1420 = vld [vmem:[#allocation2 + $0x2] sm:$0xff]
        %v1421 = vld [vmem:[#allocation2 + $0xa] sm:$0xff]
        %1422 = vst.msk [vmem:[#allocation3 + $0x8] sm:$0xff] %vm1400, %v1420
        %1423 = vst.msk [vmem:[#allocation3 + $0x18] sm:$0xff] %vm1400, %v1421
        %v1424 = vld [vmem:[#allocation3] sm:$0xff]
        %v1425 = vld [vmem:[#allocation3 + $0x8] sm:$0xff]
        %v1426 = vld [vmem:[#allocation3 + $0x10] sm:$0xff]
        %v1427 = vld [vmem:[#allocation3 + $0x18] sm:$0xff]
        %v1428 = vpack.c.bf16 %v1426, %v1424
        %v1429 = vpack.c.bf16 %v1427, %v1425
        %v1430 = vld [vmem:[%s9] sm:$0xf]
        %v1431 = vld [vmem:[%s9 + $0x4] sm:$0xf]
        %v1432 = vld [vmem:[%s9 + $0x8] sm:$0xf]
        %v1433 = vld [vmem:[%s9 + $0xc] sm:$0xf]
        %v1434 = vld [vmem:[%s9 + $0x10] sm:$0xf]
        %v1435 = vld [vmem:[%s9 + $0x14] sm:$0xf]
        %v1436 = vld [vmem:[%s9 + $0x18] sm:$0xf]
        %v1437 = vld [vmem:[%s9 + $0x1c] sm:$0xf]
        %v1438 = vld [vmem:[%s9 + $0x20] sm:$0xf]
        %v1439 = vld [vmem:[%s9 + $0x24] sm:$0xf]
        %v1440 = vld [vmem:[%s9 + $0x28] sm:$0xf]
        %v1441 = vld [vmem:[%s9 + $0x2c] sm:$0xf]
        %v1442 = vld [vmem:[%s9 + $0x30] sm:$0xf]
        %v1443 = vld [vmem:[%s9 + $0x34] sm:$0xf]
        %v1444 = vld [vmem:[%s9 + $0x38] sm:$0xf]
        %v1445 = vld [vmem:[%s9 + $0x3c] sm:$0xf]
        %v1446 = vld [vmem:[%s9 + $0x40] sm:$0xf]
        %v1447 = vld [vmem:[%s9 + $0x44] sm:$0xf]
        %v1448 = vld [vmem:[%s9 + $0x48] sm:$0xf]
        %v1449 = vld [vmem:[%s9 + $0x4c] sm:$0xf]
        %v1450 = vld [vmem:[%s9 + $0x50] sm:$0xf]
        %v1451 = vld [vmem:[%s9 + $0x54] sm:$0xf]
        %v1452 = vld [vmem:[%s9 + $0x58] sm:$0xf]
        %v1453 = vld [vmem:[%s9 + $0x5c] sm:$0xf]
        %v1454 = vld [vmem:[%s10] sm:$0x1]
        %v1456 = vlaneseq
        %v1457 = vshrl.u32 %v1456, 7
        %v1458 = vsub.s32 0, %v1457
        %v1459 = vrot.slane %v1454, %v1458
        %v1485 = vunpack.c.l.b16 %v1430
        %v1486 = vunpack.c.l.b16 %v1431
        %v1487 = vunpack.c.l.b16 %v1432
        %v1488 = vunpack.c.l.b16 %v1433
        %v1489 = vunpack.c.l.b16 %v1434
        %v1490 = vunpack.c.l.b16 %v1435
        %v1491 = vunpack.c.l.b16 %v1436
        %v1492 = vunpack.c.l.b16 %v1437
        %v1493 = vunpack.c.l.b16 %v1438
        %v1494 = vunpack.c.l.b16 %v1439
        %v1495 = vunpack.c.l.b16 %v1440
        %v1496 = vunpack.c.l.b16 %v1441
        %v1497 = vunpack.c.l.b16 %v1442
        %v1498 = vunpack.c.l.b16 %v1443
        %v1499 = vunpack.c.l.b16 %v1444
        %v1500 = vunpack.c.l.b16 %v1445
        %v1501 = vunpack.c.l.b16 %v1446
        %v1502 = vunpack.c.l.b16 %v1447
        %v1503 = vunpack.c.l.b16 %v1448
        %v1504 = vunpack.c.l.b16 %v1449
        %v1505 = vunpack.c.l.b16 %v1450
        %v1506 = vunpack.c.l.b16 %v1451
        %v1507 = vunpack.c.l.b16 %v1452
        %v1508 = vunpack.c.l.b16 %v1453
        %v1509 = vpack.c.b16 %v1486, %v1485
        %v1510 = vpack.c.b16 %v1488, %v1487
        %v1511 = vpack.c.b16 %v1490, %v1489
        %v1512 = vpack.c.b16 %v1492, %v1491
        %v1513 = vpack.c.b16 %v1494, %v1493
        %v1514 = vpack.c.b16 %v1496, %v1495
        %v1515 = vpack.c.b16 %v1498, %v1497
        %v1516 = vpack.c.b16 %v1500, %v1499
        %v1517 = vpack.c.b16 %v1502, %v1501
        %v1518 = vpack.c.b16 %v1504, %v1503
        %v1519 = vpack.c.b16 %v1506, %v1505
        %v1520 = vpack.c.b16 %v1508, %v1507
        %v1534 = vsel %vm1400, %v1429, 0
        %1536 = vmatprep.subr.bf16.mxu0 0
        %1537 = vmatpush1.bf16.msra.mxu0 %v1509
        %1538 = vmatprep.subr.bf16.mxu0 0
        %1539 = vmatpush1.bf16.msra.mxu0 %v1510
        %1540 = vmatprep.subr.bf16.mxu0 0
        %1541 = vmatpush1.bf16.msra.mxu0 %v1511
        %1542 = vmatprep.subr.bf16.mxu0 0
        %1543 = vmatpush1.bf16.msra.mxu0 %v1512
        %1544 = vmatprep.subr.bf16.mxu0 0
        %1545 = vmatpush1.bf16.msra.mxu0 %v1513
        %1546 = vmatprep.subr.bf16.mxu0 0
        %1547 = vmatpush1.bf16.msra.mxu0 %v1514
        %1548 = vmatprep.subr.bf16.mxu0 0
        %1549 = vmatpush1.bf16.msra.mxu0 %v1515
        %1550 = vmatprep.subr.bf16.mxu0 0
        %1551 = vmatpush1.bf16.msra.mxu0 %v1516
        %1552 = vmatprep.subr.bf16.mxu0 0
        %1553 = vmatpush1.bf16.msra.mxu0 %v1517
        %1554 = vmatprep.subr.bf16.mxu0 0
        %1555 = vmatpush1.bf16.msra.mxu0 %v1518
        %1556 = vmatprep.subr.bf16.mxu0 0
        %1557 = vmatpush1.bf16.msra.mxu0 %v1519
        %1558 = vmatprep.subr.bf16.mxu0 0
        %1559 = vmatpush1.bf16.msra.mxu0 %v1520
        %1560 = vmatprep.subr.bf16.mxu0 0
        %1561 = vmatpush1.bf16.msra.mxu0 0
        %1562 = vmatprep.subr.bf16.mxu0 0
        %1563 = vmatpush1.bf16.msra.mxu0 0
        %1564 = vmatprep.subr.bf16.mxu0 0
        %1565 = vmatpush1.bf16.msra.mxu0 0
        %1566 = vmatprep.subr.bf16.mxu0 0
        %1567 = vmatpush1.bf16.msra.mxu0 0
        %1568 = vmatprep.mubr.bf16.mxu0 %v1534
        %1569 = vmatmul.mubr.bf16.gmra.mrb[0].mxu0 %v1428
        %v1570 = vpop.f32.mrb[0].mxu0
        %v1571 = vadd.f32 %v1459, %v1570
        %v1572 = vpop.f32.mrb[0].mxu0
        %v1573 = vpop.f32.mrb[0].mxu0
        %v1574 = vadd.f32 %v1459, %v1573
        %v1575 = vpop.f32.mrb[0].mxu0
        %1576 = vdwg.mxu0
        %vm1577 = vcmp.gt.f32.partialorder %v1571, 0.0
        %vm1578 = vcmp.gt.f32.partialorder %v1574, 0.0
        %v1579 = vmul.f32 %v1571, 0.1
        %v1580 = vmul.f32 %v1574, 0.1
        %v1581 = vsel %vm1577, %v1571, %v1579
        %v1582 = vsel %vm1578, %v1574, %v1580
        %vm1583 = vcmask 517120
        %1584 = vst.msk [vmem:[#allocation2] sm:$0x3] %vm1583, 0.0
        %1585 = vst.msk [vmem:[#allocation2 + $0x12] sm:$0x3] %vm1583, 0.0
        %1586 = vst.msk [vmem:[#allocation2 + $0x2] sm:$0xff] %vm1400, %v1581
        %1587 = vst.msk [vmem:[#allocation2 + $0xa] sm:$0xff] %vm1400, %v1582
        %v1588 = vld [vmem:[#allocation2] sm:$0xff]
        %v1589 = vld [vmem:[#allocation2 + $0x8] sm:$0xff]
        %1590 = vst.msk [vmem:[#allocation3] sm:$0xff] %vm1400, %v1588
        %1591 = vst.msk [vmem:[#allocation3 + $0x10] sm:$0xff] %vm1400, %v1589
        %v1592 = vld [vmem:[#allocation2 + $0x2] sm:$0xff]
        %v1593 = vld [vmem:[#allocation2 + $0xa] sm:$0xff]
        %1596 = vrot.lane.b32.xlu0 %v1592, 64
        %v1597 = vpop.permute.xlu0 %1596
        %1598 = vrot.lane.b32.xlu0 %v1593, 64
        %v1599 = vpop.permute.xlu0 %1598
        %1602 = vst.msk [vmem:[#allocation3] sm:$0xff] %vm1417, %v1597
        %1603 = vst.msk [vmem:[#allocation3 + $0x10] sm:$0xff] %vm1417, %v1599
        %v1604 = vld [vmem:[#allocation2 + $0x4] sm:$0xff]
        %v1605 = vld [vmem:[#allocation2 + $0xc] sm:$0xff]
        %1606 = vst.msk [vmem:[#allocation3 + $0x8] sm:$0xff] %vm1400, %v1604
        %1607 = vst.msk [vmem:[#allocation3 + $0x18] sm:$0xff] %vm1400, %v1605
        %v1608 = vld [vmem:[#allocation3] sm:$0xff]
        %v1609 = vld [vmem:[#allocation3 + $0x8] sm:$0xff]
        %v1610 = vld [vmem:[#allocation3 + $0x10] sm:$0xff]
        %v1611 = vld [vmem:[#allocation3 + $0x18] sm:$0xff]
        %v1612 = vpack.c.bf16 %v1610, %v1608
        %v1613 = vpack.c.bf16 %v1611, %v1609
        %v1614 = vld [vmem:[%s11] sm:$0xf]
        %v1615 = vld [vmem:[%s11 + $0x4] sm:$0xf]
        %v1616 = vld [vmem:[%s11 + $0x8] sm:$0xf]
        %v1617 = vld [vmem:[%s11 + $0xc] sm:$0xf]
        %v1618 = vld [vmem:[%s11 + $0x10] sm:$0xf]
        %v1619 = vld [vmem:[%s11 + $0x14] sm:$0xf]
        %v1620 = vld [vmem:[%s11 + $0x18] sm:$0xf]
        %v1621 = vld [vmem:[%s11 + $0x1c] sm:$0xf]
        %v1622 = vld [vmem:[%s11 + $0x20] sm:$0xf]
        %v1623 = vld [vmem:[%s11 + $0x24] sm:$0xf]
        %v1624 = vld [vmem:[%s11 + $0x28] sm:$0xf]
        %v1625 = vld [vmem:[%s11 + $0x2c] sm:$0xf]
        %v1626 = vld [vmem:[%s11 + $0x30] sm:$0xf]
        %v1627 = vld [vmem:[%s11 + $0x34] sm:$0xf]
        %v1628 = vld [vmem:[%s11 + $0x38] sm:$0xf]
        %v1629 = vld [vmem:[%s11 + $0x3c] sm:$0xf]
        %v1630 = vld [vmem:[%s11 + $0x40] sm:$0xf]
        %v1631 = vld [vmem:[%s11 + $0x44] sm:$0xf]
        %v1632 = vld [vmem:[%s11 + $0x48] sm:$0xf]
        %v1633 = vld [vmem:[%s11 + $0x4c] sm:$0xf]
        %v1634 = vld [vmem:[%s11 + $0x50] sm:$0xf]
        %v1635 = vld [vmem:[%s11 + $0x54] sm:$0xf]
        %v1636 = vld [vmem:[%s11 + $0x58] sm:$0xf]
        %v1637 = vld [vmem:[%s11 + $0x5c] sm:$0xf]
        %v1638 = vld [vmem:[%s12] sm:$0x1]
        %v1640 = vlaneseq
        %v1641 = vshrl.u32 %v1640, 7
        %v1642 = vsub.s32 0, %v1641
        %v1643 = vrot.slane %v1638, %v1642
        %v1669 = vunpack.c.l.b16 %v1614
        %v1670 = vunpack.c.l.b16 %v1615
        %v1671 = vunpack.c.l.b16 %v1616
        %v1672 = vunpack.c.l.b16 %v1617
        %v1673 = vunpack.c.l.b16 %v1618
        %v1674 = vunpack.c.l.b16 %v1619
        %v1675 = vunpack.c.l.b16 %v1620
        %v1676 = vunpack.c.l.b16 %v1621
        %v1677 = vunpack.c.l.b16 %v1622
        %v1678 = vunpack.c.l.b16 %v1623
        %v1679 = vunpack.c.l.b16 %v1624
        %v1680 = vunpack.c.l.b16 %v1625
        %v1681 = vunpack.c.l.b16 %v1626
        %v1682 = vunpack.c.l.b16 %v1627
        %v1683 = vunpack.c.l.b16 %v1628
        %v1684 = vunpack.c.l.b16 %v1629
        %v1685 = vunpack.c.l.b16 %v1630
        %v1686 = vunpack.c.l.b16 %v1631
        %v1687 = vunpack.c.l.b16 %v1632
        %v1688 = vunpack.c.l.b16 %v1633
        %v1689 = vunpack.c.l.b16 %v1634
        %v1690 = vunpack.c.l.b16 %v1635
        %v1691 = vunpack.c.l.b16 %v1636
        %v1692 = vunpack.c.l.b16 %v1637
        %v1693 = vpack.c.b16 %v1670, %v1669
        %v1694 = vpack.c.b16 %v1672, %v1671
        %v1695 = vpack.c.b16 %v1674, %v1673
        %v1696 = vpack.c.b16 %v1676, %v1675
        %v1697 = vpack.c.b16 %v1678, %v1677
        %v1698 = vpack.c.b16 %v1680, %v1679
        %v1699 = vpack.c.b16 %v1682, %v1681
        %v1700 = vpack.c.b16 %v1684, %v1683
        %v1701 = vpack.c.b16 %v1686, %v1685
        %v1702 = vpack.c.b16 %v1688, %v1687
        %v1703 = vpack.c.b16 %v1690, %v1689
        %v1704 = vpack.c.b16 %v1692, %v1691
        %v1718 = vsel %vm1400, %v1613, 0
        %1720 = vmatprep.subr.bf16.mxu0 0
        %1721 = vmatpush1.bf16.msra.mxu0 %v1693
        %1722 = vmatprep.subr.bf16.mxu0 0
        %1723 = vmatpush1.bf16.msra.mxu0 %v1694
        %1724 = vmatprep.subr.bf16.mxu0 0
        %1725 = vmatpush1.bf16.msra.mxu0 %v1695
        %1726 = vmatprep.subr.bf16.mxu0 0
        %1727 = vmatpush1.bf16.msra.mxu0 %v1696
        %1728 = vmatprep.subr.bf16.mxu0 0
        %1729 = vmatpush1.bf16.msra.mxu0 %v1697
        %1730 = vmatprep.subr.bf16.mxu0 0
        %1731 = vmatpush1.bf16.msra.mxu0 %v1698
        %1732 = vmatprep.subr.bf16.mxu0 0
        %1733 = vmatpush1.bf16.msra.mxu0 %v1699
        %1734 = vmatprep.subr.bf16.mxu0 0
        %1735 = vmatpush1.bf16.msra.mxu0 %v1700
        %1736 = vmatprep.subr.bf16.mxu0 0
        %1737 = vmatpush1.bf16.msra.mxu0 %v1701
        %1738 = vmatprep.subr.bf16.mxu0 0
        %1739 = vmatpush1.bf16.msra.mxu0 %v1702
        %1740 = vmatprep.subr.bf16.mxu0 0
        %1741 = vmatpush1.bf16.msra.mxu0 %v1703
        %1742 = vmatprep.subr.bf16.mxu0 0
        %1743 = vmatpush1.bf16.msra.mxu0 %v1704
        %1744 = vmatprep.subr.bf16.mxu0 0
        %1745 = vmatpush1.bf16.msra.mxu0 0
        %1746 = vmatprep.subr.bf16.mxu0 0
        %1747 = vmatpush1.bf16.msra.mxu0 0
        %1748 = vmatprep.subr.bf16.mxu0 0
        %1749 = vmatpush1.bf16.msra.mxu0 0
        %1750 = vmatprep.subr.bf16.mxu0 0
        %1751 = vmatpush1.bf16.msra.mxu0 0
        %1752 = vmatprep.mubr.bf16.mxu0 %v1718
        %1753 = vmatmul.mubr.bf16.gmra.mrb[0].mxu0 %v1612
        %v1754 = vpop.f32.mrb[0].mxu0
        %v1755 = vadd.f32 %v1643, %v1754
        %v1756 = vpop.f32.mrb[0].mxu0
        %v1757 = vpop.f32.mrb[0].mxu0
        %v1758 = vadd.f32 %v1643, %v1757
        %v1759 = vpop.f32.mrb[0].mxu0
        %1760 = vdwg.mxu0
        %vm1761 = vcmp.gt.f32.partialorder %v1755, 0.0
        %vm1762 = vcmp.gt.f32.partialorder %v1758, 0.0
        %v1763 = vmul.f32 %v1755, 0.1
        %v1764 = vmul.f32 %v1758, 0.1
        %v1765 = vsel %vm1761, %v1755, %v1763
        %v1766 = vsel %vm1762, %v1758, %v1764
        %vm1767 = vcmask 519168
        %1768 = vst.msk [vmem:[#allocation2] sm:$0xf] %vm1767, 0.0
        %1769 = vst.msk [vmem:[#allocation2 + $0x14] sm:$0xf] %vm1767, 0.0
        %1770 = vst.msk [vmem:[#allocation2 + $0x4] sm:$0xff] %vm1400, %v1765
        %1771 = vst.msk [vmem:[#allocation2 + $0xc] sm:$0xff] %vm1400, %v1766
        %v1772 = vld [vmem:[#allocation2] sm:$0xff]
        %v1773 = vld [vmem:[#allocation2 + $0x8] sm:$0xff]
        %1774 = vst.msk [vmem:[#allocation3] sm:$0xff] %vm1400, %v1772
        %1775 = vst.msk [vmem:[#allocation3 + $0x10] sm:$0xff] %vm1400, %v1773
        %v1776 = vld [vmem:[#allocation2 + $0x4] sm:$0xff]
        %v1777 = vld [vmem:[#allocation2 + $0xc] sm:$0xff]
        %1780 = vrot.lane.b32.xlu0 %v1776, 64
        %v1781 = vpop.permute.xlu0 %1780
        %1782 = vrot.lane.b32.xlu0 %v1777, 64
        %v1783 = vpop.permute.xlu0 %1782
        %1786 = vst.msk [vmem:[#allocation3] sm:$0xff] %vm1417, %v1781
        %1787 = vst.msk [vmem:[#allocation3 + $0x10] sm:$0xff] %vm1417, %v1783
        %v1788 = vld [vmem:[#allocation2 + $0x8] sm:$0xff]
        %v1789 = vld [vmem:[#allocation2 + $0x10] sm:$0xff]
        %1790 = vst.msk [vmem:[#allocation3 + $0x8] sm:$0xff] %vm1400, %v1788
        %1791 = vst.msk [vmem:[#allocation3 + $0x18] sm:$0xff] %vm1400, %v1789
        %v1792 = vld [vmem:[#allocation3] sm:$0xff]
        %v1793 = vld [vmem:[#allocation3 + $0x8] sm:$0xff]
        %v1794 = vld [vmem:[#allocation3 + $0x10] sm:$0xff]
        %v1795 = vld [vmem:[#allocation3 + $0x18] sm:$0xff]
        %v1796 = vpack.c.bf16 %v1794, %v1792
        %v1797 = vpack.c.bf16 %v1795, %v1793
        %v1798 = vld [vmem:[%s13] sm:$0xf]
        %v1799 = vld [vmem:[%s13 + $0x4] sm:$0xf]
        %v1800 = vld [vmem:[%s13 + $0x8] sm:$0xf]
        %v1801 = vld [vmem:[%s13 + $0xc] sm:$0xf]
        %v1802 = vld [vmem:[%s13 + $0x10] sm:$0xf]
        %v1803 = vld [vmem:[%s13 + $0x14] sm:$0xf]
        %v1804 = vld [vmem:[%s13 + $0x18] sm:$0xf]
        %v1805 = vld [vmem:[%s13 + $0x1c] sm:$0xf]
        %v1806 = vld [vmem:[%s13 + $0x20] sm:$0xf]
        %v1807 = vld [vmem:[%s13 + $0x24] sm:$0xf]
        %v1808 = vld [vmem:[%s13 + $0x28] sm:$0xf]
        %v1809 = vld [vmem:[%s13 + $0x2c] sm:$0xf]
        %v1810 = vld [vmem:[%s13 + $0x30] sm:$0xf]
        %v1811 = vld [vmem:[%s13 + $0x34] sm:$0xf]
        %v1812 = vld [vmem:[%s13 + $0x38] sm:$0xf]
        %v1813 = vld [vmem:[%s13 + $0x3c] sm:$0xf]
        %v1814 = vld [vmem:[%s13 + $0x40] sm:$0xf]
        %v1815 = vld [vmem:[%s13 + $0x44] sm:$0xf]
        %v1816 = vld [vmem:[%s13 + $0x48] sm:$0xf]
        %v1817 = vld [vmem:[%s13 + $0x4c] sm:$0xf]
        %v1818 = vld [vmem:[%s13 + $0x50] sm:$0xf]
        %v1819 = vld [vmem:[%s13 + $0x54] sm:$0xf]
        %v1820 = vld [vmem:[%s13 + $0x58] sm:$0xf]
        %v1821 = vld [vmem:[%s13 + $0x5c] sm:$0xf]
        %v1822 = vld [vmem:[%s14] sm:$0x1]
        %v1824 = vlaneseq
        %v1825 = vshrl.u32 %v1824, 7
        %v1826 = vsub.s32 0, %v1825
        %v1827 = vrot.slane %v1822, %v1826
        %v1853 = vunpack.c.l.b16 %v1798
        %v1854 = vunpack.c.l.b16 %v1799
        %v1855 = vunpack.c.l.b16 %v1800
        %v1856 = vunpack.c.l.b16 %v1801
        %v1857 = vunpack.c.l.b16 %v1802
        %v1858 = vunpack.c.l.b16 %v1803
        %v1859 = vunpack.c.l.b16 %v1804
        %v1860 = vunpack.c.l.b16 %v1805
        %v1861 = vunpack.c.l.b16 %v1806
        %v1862 = vunpack.c.l.b16 %v1807
        %v1863 = vunpack.c.l.b16 %v1808
        %v1864 = vunpack.c.l.b16 %v1809
        %v1865 = vunpack.c.l.b16 %v1810
        %v1866 = vunpack.c.l.b16 %v1811
        %v1867 = vunpack.c.l.b16 %v1812
        %v1868 = vunpack.c.l.b16 %v1813
        %v1869 = vunpack.c.l.b16 %v1814
        %v1870 = vunpack.c.l.b16 %v1815
        %v1871 = vunpack.c.l.b16 %v1816
        %v1872 = vunpack.c.l.b16 %v1817
        %v1873 = vunpack.c.l.b16 %v1818
        %v1874 = vunpack.c.l.b16 %v1819
        %v1875 = vunpack.c.l.b16 %v1820
        %v1876 = vunpack.c.l.b16 %v1821
        %v1877 = vpack.c.b16 %v1854, %v1853
        %v1878 = vpack.c.b16 %v1856, %v1855
        %v1879 = vpack.c.b16 %v1858, %v1857
        %v1880 = vpack.c.b16 %v1860, %v1859
        %v1881 = vpack.c.b16 %v1862, %v1861
        %v1882 = vpack.c.b16 %v1864, %v1863
        %v1883 = vpack.c.b16 %v1866, %v1865
        %v1884 = vpack.c.b16 %v1868, %v1867
        %v1885 = vpack.c.b16 %v1870, %v1869
        %v1886 = vpack.c.b16 %v1872, %v1871
        %v1887 = vpack.c.b16 %v1874, %v1873
        %v1888 = vpack.c.b16 %v1876, %v1875
        %v1902 = vsel %vm1400, %v1797, 0
        %1904 = vmatprep.subr.bf16.mxu0 0
        %1905 = vmatpush1.bf16.msra.mxu0 %v1877
        %1906 = vmatprep.subr.bf16.mxu0 0
        %1907 = vmatpush1.bf16.msra.mxu0 %v1878
        %1908 = vmatprep.subr.bf16.mxu0 0
        %1909 = vmatpush1.bf16.msra.mxu0 %v1879
        %1910 = vmatprep.subr.bf16.mxu0 0
        %1911 = vmatpush1.bf16.msra.mxu0 %v1880
        %1912 = vmatprep.subr.bf16.mxu0 0
        %1913 = vmatpush1.bf16.msra.mxu0 %v1881
        %1914 = vmatprep.subr.bf16.mxu0 0
        %1915 = vmatpush1.bf16.msra.mxu0 %v1882
        %1916 = vmatprep.subr.bf16.mxu0 0
        %1917 = vmatpush1.bf16.msra.mxu0 %v1883
        %1918 = vmatprep.subr.bf16.mxu0 0
        %1919 = vmatpush1.bf16.msra.mxu0 %v1884
        %1920 = vmatprep.subr.bf16.mxu0 0
        %1921 = vmatpush1.bf16.msra.mxu0 %v1885
        %1922 = vmatprep.subr.bf16.mxu0 0
        %1923 = vmatpush1.bf16.msra.mxu0 %v1886
        %1924 = vmatprep.subr.bf16.mxu0 0
        %1925 = vmatpush1.bf16.msra.mxu0 %v1887
        %1926 = vmatprep.subr.bf16.mxu0 0
        %1927 = vmatpush1.bf16.msra.mxu0 %v1888
        %1928 = vmatprep.subr.bf16.mxu0 0
        %1929 = vmatpush1.bf16.msra.mxu0 0
        %1930 = vmatprep.subr.bf16.mxu0 0
        %1931 = vmatpush1.bf16.msra.mxu0 0
        %1932 = vmatprep.subr.bf16.mxu0 0
        %1933 = vmatpush1.bf16.msra.mxu0 0
        %1934 = vmatprep.subr.bf16.mxu0 0
        %1935 = vmatpush1.bf16.msra.mxu0 0
        %1936 = vmatprep.mubr.bf16.mxu0 %v1902
        %1937 = vmatmul.mubr.bf16.gmra.mrb[0].mxu0 %v1796
        %v1938 = vpop.f32.mrb[0].mxu0
        %v1939 = vadd.f32 %v1827, %v1938
        %v1940 = vpop.f32.mrb[0].mxu0
        %v1941 = vpop.f32.mrb[0].mxu0
        %v1942 = vadd.f32 %v1827, %v1941
        %v1943 = vpop.f32.mrb[0].mxu0
        %1944 = vdwg.mxu0
        %vm1945 = vcmp.gt.f32.partialorder %v1939, 0.0
        %vm1946 = vcmp.gt.f32.partialorder %v1942, 0.0
        %v1947 = vmul.f32 %v1939, 0.1
        %v1948 = vmul.f32 %v1942, 0.1
        %v1949 = vsel %vm1945, %v1939, %v1947
        %v1950 = vsel %vm1946, %v1942, %v1948
        %1951 = vst.msk [vmem:[#allocation2] sm:$0xff] %vm1400, 0.0
        %1952 = vst.msk [vmem:[#allocation2 + $0x18] sm:$0xff] %vm1400, 0.0
        %1953 = vst.msk [vmem:[#allocation2 + $0x8] sm:$0xff] %vm1400, %v1949
        %1954 = vst.msk [vmem:[#allocation2 + $0x10] sm:$0xff] %vm1400, %v1950
        %v1955 = vld [vmem:[#allocation2] sm:$0xff]
        %v1956 = vld [vmem:[#allocation2 + $0x8] sm:$0xff]
        %1957 = vst.msk [vmem:[#allocation3] sm:$0xff] %vm1400, %v1955
        %1958 = vst.msk [vmem:[#allocation3 + $0x10] sm:$0xff] %vm1400, %v1956
        %v1959 = vld [vmem:[#allocation2 + $0x8] sm:$0xff]
        %v1960 = vld [vmem:[#allocation2 + $0x10] sm:$0xff]
        %1963 = vrot.lane.b32.xlu0 %v1959, 64
        %v1964 = vpop.permute.xlu0 %1963
        %1965 = vrot.lane.b32.xlu0 %v1960, 64
        %v1966 = vpop.permute.xlu0 %1965
        %1969 = vst.msk [vmem:[#allocation3] sm:$0xff] %vm1417, %v1964
        %1970 = vst.msk [vmem:[#allocation3 + $0x10] sm:$0xff] %vm1417, %v1966
        %v1971 = vld [vmem:[#allocation2 + $0x10] sm:$0xff]
        %v1972 = vld [vmem:[#allocation2 + $0x18] sm:$0xff]
        %1973 = vst.msk [vmem:[#allocation3 + $0x8] sm:$0xff] %vm1400, %v1971
        %1974 = vst.msk [vmem:[#allocation3 + $0x18] sm:$0xff] %vm1400, %v1972
        %v1975 = vld [vmem:[#allocation3] sm:$0xff]
        %v1976 = vld [vmem:[#allocation3 + $0x8] sm:$0xff]
        %v1977 = vld [vmem:[#allocation3 + $0x10] sm:$0xff]
        %v1978 = vld [vmem:[#allocation3 + $0x18] sm:$0xff]
        %v1979 = vpack.c.bf16 %v1977, %v1975
        %v1980 = vpack.c.bf16 %v1978, %v1976
        %v1981 = vld [vmem:[%s15] sm:$0xf]
        %v1982 = vld [vmem:[%s15 + $0x4] sm:$0xf]
        %v1983 = vld [vmem:[%s15 + $0x8] sm:$0xf]
        %v1984 = vld [vmem:[%s15 + $0xc] sm:$0xf]
        %v1985 = vld [vmem:[%s15 + $0x10] sm:$0xf]
        %v1986 = vld [vmem:[%s15 + $0x14] sm:$0xf]
        %v1987 = vld [vmem:[%s15 + $0x18] sm:$0xf]
        %v1988 = vld [vmem:[%s15 + $0x1c] sm:$0xf]
        %v1989 = vld [vmem:[%s15 + $0x20] sm:$0xf]
        %v1990 = vld [vmem:[%s15 + $0x24] sm:$0xf]
        %v1991 = vld [vmem:[%s15 + $0x28] sm:$0xf]
        %v1992 = vld [vmem:[%s15 + $0x2c] sm:$0xf]
        %v1993 = vld [vmem:[%s15 + $0x30] sm:$0xf]
        %v1994 = vld [vmem:[%s15 + $0x34] sm:$0xf]
        %v1995 = vld [vmem:[%s15 + $0x38] sm:$0xf]
        %v1996 = vld [vmem:[%s15 + $0x3c] sm:$0xf]
        %v1997 = vld [vmem:[%s15 + $0x40] sm:$0xf]
        %v1998 = vld [vmem:[%s15 + $0x44] sm:$0xf]
        %v1999 = vld [vmem:[%s15 + $0x48] sm:$0xf]
        %v2000 = vld [vmem:[%s15 + $0x4c] sm:$0xf]
        %v2001 = vld [vmem:[%s15 + $0x50] sm:$0xf]
        %v2002 = vld [vmem:[%s15 + $0x54] sm:$0xf]
        %v2003 = vld [vmem:[%s15 + $0x58] sm:$0xf]
        %v2004 = vld [vmem:[%s15 + $0x5c] sm:$0xf]
        %v2005 = vld [vmem:[%s16] sm:$0x1]
        %v2007 = vlaneseq
        %v2008 = vshrl.u32 %v2007, 7
        %v2009 = vsub.s32 0, %v2008
        %v2010 = vrot.slane %v2005, %v2009
        %v2036 = vunpack.c.l.b16 %v1981
        %v2037 = vunpack.c.l.b16 %v1982
        %v2038 = vunpack.c.l.b16 %v1983
        %v2039 = vunpack.c.l.b16 %v1984
        %v2040 = vunpack.c.l.b16 %v1985
        %v2041 = vunpack.c.l.b16 %v1986
        %v2042 = vunpack.c.l.b16 %v1987
        %v2043 = vunpack.c.l.b16 %v1988
        %v2044 = vunpack.c.l.b16 %v1989
        %v2045 = vunpack.c.l.b16 %v1990
        %v2046 = vunpack.c.l.b16 %v1991
        %v2047 = vunpack.c.l.b16 %v1992
        %v2048 = vunpack.c.l.b16 %v1993
        %v2049 = vunpack.c.l.b16 %v1994
        %v2050 = vunpack.c.l.b16 %v1995
        %v2051 = vunpack.c.l.b16 %v1996
        %v2052 = vunpack.c.l.b16 %v1997
        %v2053 = vunpack.c.l.b16 %v1998
        %v2054 = vunpack.c.l.b16 %v1999
        %v2055 = vunpack.c.l.b16 %v2000
        %v2056 = vunpack.c.l.b16 %v2001
        %v2057 = vunpack.c.l.b16 %v2002
        %v2058 = vunpack.c.l.b16 %v2003
        %v2059 = vunpack.c.l.b16 %v2004
        %v2060 = vpack.c.b16 %v2037, %v2036
        %v2061 = vpack.c.b16 %v2039, %v2038
        %v2062 = vpack.c.b16 %v2041, %v2040
        %v2063 = vpack.c.b16 %v2043, %v2042
        %v2064 = vpack.c.b16 %v2045, %v2044
        %v2065 = vpack.c.b16 %v2047, %v2046
        %v2066 = vpack.c.b16 %v2049, %v2048
        %v2067 = vpack.c.b16 %v2051, %v2050
        %v2068 = vpack.c.b16 %v2053, %v2052
        %v2069 = vpack.c.b16 %v2055, %v2054
        %v2070 = vpack.c.b16 %v2057, %v2056
        %v2071 = vpack.c.b16 %v2059, %v2058
        %v2085 = vsel %vm1400, %v1980, 0
        %2087 = vmatprep.subr.bf16.mxu0 0
        %2088 = vmatpush1.bf16.msra.mxu0 %v2060
        %2089 = vmatprep.subr.bf16.mxu0 0
        %2090 = vmatpush1.bf16.msra.mxu0 %v2061
        %2091 = vmatprep.subr.bf16.mxu0 0
        %2092 = vmatpush1.bf16.msra.mxu0 %v2062
        %2093 = vmatprep.subr.bf16.mxu0 0
        %2094 = vmatpush1.bf16.msra.mxu0 %v2063
        %2095 = vmatprep.subr.bf16.mxu0 0
        %2096 = vmatpush1.bf16.msra.mxu0 %v2064
        %2097 = vmatprep.subr.bf16.mxu0 0
        %2098 = vmatpush1.bf16.msra.mxu0 %v2065
        %2099 = vmatprep.subr.bf16.mxu0 0
        %2100 = vmatpush1.bf16.msra.mxu0 %v2066
        %2101 = vmatprep.subr.bf16.mxu0 0
        %2102 = vmatpush1.bf16.msra.mxu0 %v2067
        %2103 = vmatprep.subr.bf16.mxu0 0
        %2104 = vmatpush1.bf16.msra.mxu0 %v2068
        %2105 = vmatprep.subr.bf16.mxu0 0
        %2106 = vmatpush1.bf16.msra.mxu0 %v2069
        %2107 = vmatprep.subr.bf16.mxu0 0
        %2108 = vmatpush1.bf16.msra.mxu0 %v2070
        %2109 = vmatprep.subr.bf16.mxu0 0
        %2110 = vmatpush1.bf16.msra.mxu0 %v2071
        %2111 = vmatprep.subr.bf16.mxu0 0
        %2112 = vmatpush1.bf16.msra.mxu0 0
        %2113 = vmatprep.subr.bf16.mxu0 0
        %2114 = vmatpush1.bf16.msra.mxu0 0
        %2115 = vmatprep.subr.bf16.mxu0 0
        %2116 = vmatpush1.bf16.msra.mxu0 0
        %2117 = vmatprep.subr.bf16.mxu0 0
        %2118 = vmatpush1.bf16.msra.mxu0 0
        %2119 = vmatprep.mubr.bf16.mxu0 %v2085
        %2120 = vmatmul.mubr.bf16.gmra.mrb[0].mxu0 %v1979
        %v2121 = vpop.f32.mrb[0].mxu0
        %v2122 = vadd.f32 %v2010, %v2121
        %v2123 = vpop.f32.mrb[0].mxu0
        %v2124 = vpop.f32.mrb[0].mxu0
        %v2125 = vadd.f32 %v2010, %v2124
        %v2126 = vpop.f32.mrb[0].mxu0
        %2127 = vdwg.mxu0
        %vm2128 = vcmp.gt.f32.partialorder %v2122, 0.0
        %vm2129 = vcmp.gt.f32.partialorder %v2125, 0.0
        %v2130 = vmul.f32 %v2122, 0.1
        %v2131 = vmul.f32 %v2125, 0.1
        %v2132 = vsel %vm2128, %v2122, %v2130
        %v2133 = vsel %vm2129, %v2125, %v2131
        %v2134 = vld [vmem:[%s17] sm:$0x1]
        %v2135 = vpack.c.bf16 %v2133, %v2132
        %v2136 = vld [vmem:[%s18] sm:$0x3]
        %2138 = vset.pattern.permute.xlu0 0
        %2139 = vperm.xlu0 %2138, %v2136
        %v2140 = vpop.permute.xlu0 %2139
        %v2143 = vsel %vm1400, %v2134, 0
        %v2146 = vsel %vm1400, %v2135, 0
        %2148 = vmatprep.subr.bf16.mxu0 0
        %2149 = vmatpush1.bf16.xpose.msra.mxu0 %v2146
        %2150 = vmatprep.subr.bf16.mxu0 0
        %2151 = vmatpush1.bf16.xpose.msra.mxu0 0
        %2152 = vmatprep.subr.bf16.mxu0 0
        %2153 = vmatpush1.bf16.xpose.msra.mxu0 0
        %2154 = vmatprep.subr.bf16.mxu0 0
        %2155 = vmatpush1.bf16.xpose.msra.mxu0 0
        %2156 = vmatprep.subr.bf16.mxu0 0
        %2157 = vmatpush1.bf16.xpose.msra.mxu0 0
        %2158 = vmatprep.subr.bf16.mxu0 0
        %2159 = vmatpush1.bf16.xpose.msra.mxu0 0
        %2160 = vmatprep.subr.bf16.mxu0 0
        %2161 = vmatpush1.bf16.xpose.msra.mxu0 0
        %2162 = vmatprep.subr.bf16.mxu0 0
        %2163 = vmatpush1.bf16.xpose.msra.mxu0 0
        %2164 = vmatprep.subr.bf16.mxu0 0
        %2165 = vmatpush1.bf16.xpose.msra.mxu0 0
        %2166 = vmatprep.subr.bf16.mxu0 0
        %2167 = vmatpush1.bf16.xpose.msra.mxu0 0
        %2168 = vmatprep.subr.bf16.mxu0 0
        %2169 = vmatpush1.bf16.xpose.msra.mxu0 0
        %2170 = vmatprep.subr.bf16.mxu0 0
        %2171 = vmatpush1.bf16.xpose.msra.mxu0 0
        %2172 = vmatprep.subr.bf16.mxu0 0
        %2173 = vmatpush1.bf16.xpose.msra.mxu0 0
        %2174 = vmatprep.subr.bf16.mxu0 0
        %2175 = vmatpush1.bf16.xpose.msra.mxu0 0
        %2176 = vmatprep.subr.bf16.mxu0 0
        %2177 = vmatpush1.bf16.xpose.msra.mxu0 0
        %2178 = vmatprep.subr.bf16.mxu0 0
        %2179 = vmatpush1.bf16.xpose.msra.mxu0 0
        %2180 = vmatprep.mubr.bf16.mxu0 0
        %2181 = vmatmul.mubr.bf16.gmra.mrb[0].mxu0 %v2143
        %v2182 = vpop.f32.mrb[0].mxu0
        %v2183 = vadd.f32 %v2140, %v2182
        %v2184 = vpop.f32.mrb[0].mxu0
        %v2185 = vpop.f32.mrb[0].mxu0
        %v2186 = vpop.f32.mrb[0].mxu0
        %2187 = vdwg.mxu0
        %vm2188 = vcmask 123904
        %2189 = vst.msk [vmem:[%s664] sm:$0x3] %vm2188, %v2183
        %v2190 = vxor.u32 %v2183, 2147483648
        %v2191 = vmul.f32 %v2190, 1.442695
        %v2192 = vpow.pop %v2191
        %v2193 = vadd.f32 %v2192, 1.0
        %v2194 = vrcp.pop %v2193
        %v2195 = vmul.f32 1.0, %v2194
        %2196 = vst.msk [vmem:[%s668] sm:$0x3] %vm2188, %v2195
        %p2197 = scmp.lt.s32.totalorder %s34, 1
        %s2198 = scalar_select %p2197, %s34, 1
        %s2199 = smul.addr %s2198, 2
        %s2200 = scalar_lea.vmem %s19, %s2199
        %p2201 = scmp.lt.s32.totalorder %s34, 1
        %s2202 = scalar_select %p2201, %s34, 1
        %s2203 = smul.addr %s2202, 2
        %s2204 = scalar_lea.vmem %s20, %s2203
        // Predicated region
        $region105: #{forward.1} parent=95 // pred_check
          %p2205 = pneg %p456
        $region106: #{forward.1} parent=95 // pred_check_branch
          %2207 = sbr.rel (%p2205) target = $region108
        $region107: #{forward.1} parent=95 // pred_region
          _
        $region108: #{forward.1} parent=95 // pred_fallthru
          _
        // Predicated region
        $region109: #{forward.1} parent=95 // pred_check
          %p2208 = pneg %p482
        $region110: #{forward.1} parent=95 // pred_check_branch
          %2210 = sbr.rel (%p2208) target = $region112
        $region111: #{forward.1} parent=95 // pred_region
          _
        $region112: #{forward.1} parent=95 // pred_fallthru
          _
      $region96: #{forward.1} parent=5 // pred_fallthru
        _
      %p2211 = scmp.le.s32.totalorder 2, %s29
      // Predicated region
      $region113: #{forward.1} parent=5 // pred_check
        %p2212 = pneg %p2211
      $region114: #{forward.1} parent=5 // pred_check_branch
        %2214 = sbr.rel (%p2212) target = $region116
      $region115: #{forward.1} parent=5 // pred_region
        %s2215 = ssub.s32 %s29, 2
        // Predicated region
        $region117: #{forward.1} parent=115 // pred_check
          %p2216 = pneg %p462
        $region118: #{forward.1} parent=115 // pred_check_branch
          %2218 = sbr.rel (%p2216) target = $region120
        $region119: #{forward.1} parent=115 // pred_region
          %p2219 = scmp.lt.s32.totalorder %s35, 1
          %s2220 = scalar_select %p2219, %s35, 1
          %s2221 = smul.addr %s2220, 2
          %s2222 = scalar_lea.vmem %s19, %s2221
        $region120: #{forward.1} parent=115 // pred_fallthru
          _
        // Predicated region
        $region121: #{forward.1} parent=115 // pred_check
          %p2223 = pneg %p488
        $region122: #{forward.1} parent=115 // pred_check_branch
          %2225 = sbr.rel (%p2223) target = $region124
        $region123: #{forward.1} parent=115 // pred_region
          %p2226 = scmp.lt.s32.totalorder %s35, 1
          %s2227 = scalar_select %p2226, %s35, 1
          %s2228 = smul.addr %s2227, 2
          %s2229 = scalar_lea.vmem %s20, %s2228
        $region124: #{forward.1} parent=115 // pred_fallthru
          _
      $region116: #{forward.1} parent=5 // pred_fallthru
        _
    $region6: #{forward.1} parent=1 // loop_footer
      %s33 = sadd.s32 1, %s29
    $region7: #{forward.1} parent=1 // loop_footer_branch
      %28 = sbr.rel target = $region3
    $region8: #{forward.1} parent=1 // loop_exit
      _
    %2230 = vsyncpa [#allocation5], 1
    %s2231 = scalar_lea.sflag [#allocation5], 1
    %2232 = vsyncpa %s2231, 1
    %2233 = vsyncpa [#allocation7], 1

</llo_original>
